<compile_context>
chip_gen: v7x
topology: tpu7x:2x2x1
jax: 0.10.0
libtpu: 0.0.40
codegen_flags: <defaults>
</compile_context>

<pallas_src>
import functools

import jax
import jax.numpy as jnp
from jax import lax
from jax.experimental import pallas as pl
from jax.experimental.pallas import tpu as pltpu


_TILE_M = 1024  # rows of the im2col matrix per grid step (VMEM-safe on v7x)


# ----------------------------------------------------------------------------
# Pallas kernels
# ----------------------------------------------------------------------------
def _gemm_bias_kernel(x_ref, w_ref, b_ref, o_ref, *, relu):
    # bf16 operands on the MXU, f32 accumulation; bias + ReLU in f32.
    acc = jnp.dot(x_ref[...], w_ref[...], preferred_element_type=jnp.float32)
    acc = acc + b_ref[...]
    if relu:
        acc = jnp.maximum(acc, 0.0)
    o_ref[...] = acc.astype(o_ref.dtype)


def gemm_bias(x, w, b, *, relu, out_dtype, tile_m=_TILE_M):
    """x: (M, K) bf16, w: (K, N) bf16, b: (1, N) f32 -> (M, N) out_dtype."""
    M, K = x.shape
    K2, N = w.shape
    assert K == K2, (K, K2)
    tile_m = min(tile_m, M)  # tile_m is either 1024 (mult. of 8/16) or full M
    grid = (pl.cdiv(M, tile_m),)
    cost = pl.CostEstimate(
        flops=2 * M * K * N,
        transcendentals=0,
        bytes_accessed=(M * K * 2 + K * N * 2 + N * 4
                        + M * N * jnp.dtype(out_dtype).itemsize),
    )
    return pl.pallas_call(
        functools.partial(_gemm_bias_kernel, relu=relu),
        out_shape=jax.ShapeDtypeStruct((M, N), out_dtype),
        grid=grid,
        in_specs=[
            pl.BlockSpec((tile_m, K), lambda i: (i, 0)),   # im2col rows, tiled
            pl.BlockSpec((K, N), lambda i: (0, 0)),        # weights, replicated
            pl.BlockSpec((1, N), lambda i: (0, 0)),        # bias, replicated
        ],
        out_specs=pl.BlockSpec((tile_m, N), lambda i: (i, 0)),
        compiler_params=pltpu.CompilerParams(
            dimension_semantics=("parallel",)),
        cost_estimate=cost,
    )(x, w, b)


def _fc_head_kernel(x_ref, w1_ref, b1_ref, w2_ref, b2_ref, o_ref):
    # Fused Linear(conv_out,512)+ReLU and Linear(512,n_actions_padded_to_128).
    h = jnp.dot(x_ref[...], w1_ref[...], preferred_element_type=jnp.float32)
    h = jnp.maximum(h + b1_ref[...], 0.0)
    out = jnp.dot(h.astype(jnp.bfloat16), w2_ref[...],
                  preferred_element_type=jnp.float32)
    o_ref[...] = out + b2_ref[...]


def fc_head(x, w1, b1, w2p, b2p, *, tile_m=_TILE_M):
    """x: (M, K) bf16; w1: (K, 512) bf16; w2p: (512, 128) bf16 -> (M, 128) f32."""
    M, K = x.shape
    H = w1.shape[1]
    NP = w2p.shape[1]
    tile_m = min(tile_m, M)
    grid = (pl.cdiv(M, tile_m),)
    cost = pl.CostEstimate(
        flops=2 * M * K * H + 2 * M * H * NP,
        transcendentals=0,
        bytes_accessed=(M * K + K * H + H * NP) * 2 + (H + NP) * 4 + M * NP * 4,
    )
    return pl.pallas_call(
        _fc_head_kernel,
        out_shape=jax.ShapeDtypeStruct((M, NP), jnp.float32),
        grid=grid,
        in_specs=[
            pl.BlockSpec((tile_m, K), lambda i: (i, 0)),
            pl.BlockSpec((K, H), lambda i: (0, 0)),
            pl.BlockSpec((1, H), lambda i: (0, 0)),
            pl.BlockSpec((H, NP), lambda i: (0, 0)),
            pl.BlockSpec((1, NP), lambda i: (0, 0)),
        ],
        out_specs=pl.BlockSpec((tile_m, NP), lambda i: (i, 0)),
        compiler_params=pltpu.CompilerParams(
            dimension_semantics=("parallel",)),
        cost_estimate=cost,
    )(x, w1, b1, w2p, b2p)


# ----------------------------------------------------------------------------
# Conv2d (NHWC, no padding) via im2col + Pallas GEMM
# ----------------------------------------------------------------------------
def _im2col_nhwc(x, kh, kw, stride):
    """x: (N, H, W, C) -> (N*OH*OW, KH*KW*C).  Column order = (kh, kw, c)."""
    n, h, w, c = x.shape
    oh = (h - kh) // stride + 1
    ow = (w - kw) // stride + 1
    cols = []
    for i in range(kh):
        for j in range(kw):
            cols.append(x[:, i:i + stride * oh:stride,
                          j:j + stride * ow:stride, :])
    # Stack before the channel axis: (N, OH, OW, KH*KW, C) — C stays on lanes,
    # no transpose needed before the reshape.
    patches = jnp.stack(cols, axis=3)
    return patches.reshape(n * oh * ow, kh * kw * c), oh, ow


def conv2d_nhwc(x, w_kkc_o, b, *, stride, kh, kw):
    """x: (N,H,W,C) bf16, w: (KH*KW*C, O) bf16, b: (1,O) f32 -> (N,OH,OW,O) bf16."""
    n = x.shape[0]
    o = w_kkc_o.shape[1]
    patches, oh, ow = _im2col_nhwc(x, kh, kw, stride)
    y = gemm_bias(patches, w_kkc_o, b, relu=True, out_dtype=jnp.bfloat16)
    return y.reshape(n, oh, ow, o)


# ----------------------------------------------------------------------------
# Parameters
# ----------------------------------------------------------------------------
def _conv_out_hw(input_shape):
    h, w = input_shape[1], input_shape[2]
    h = (h - 8) // 4 + 1; w = (w - 8) // 4 + 1
    h = (h - 4) // 2 + 1; w = (w - 4) // 2 + 1
    h = h - 3 + 1;        w = w - 3 + 1
    return h, w


def init_params(key, input_shape, n_actions):
    """PyTorch-layout f32 parameters (what nn.Module would hold)."""
    c = input_shape[0]
    ks = jax.random.split(key, 10)

    def u(k, shape, fan_in):
        bound = 1.0 / jnp.sqrt(fan_in)
        return jax.random.uniform(k, shape, jnp.float32, -bound, bound)

    p = {}
    p["c1_w"] = u(ks[0], (32, c, 8, 8), c * 8 * 8)
    p["c1_b"] = u(ks[1], (32,), c * 8 * 8)
    p["c2_w"] = u(ks[2], (64, 32, 4, 4), 32 * 4 * 4)
    p["c2_b"] = u(ks[3], (64,), 32 * 4 * 4)
    p["c3_w"] = u(ks[4], (64, 64, 3, 3), 64 * 3 * 3)
    p["c3_b"] = u(ks[5], (64,), 64 * 3 * 3)

    oh, ow = _conv_out_hw(input_shape)
    conv_out = 64 * oh * ow
    p["f1_w"] = u(ks[6], (512, conv_out), conv_out)
    p["f1_b"] = u(ks[7], (512,), conv_out)
    p["f2_w"] = u(ks[8], (n_actions, 512), 512)
    p["f2_b"] = u(ks[9], (n_actions,), 512)
    return p


def prepare_params(params, input_shape, n_actions):
    """One-time re-layout to kernel-friendly (K, N) bf16 weights."""
    def conv_w(w, scale=1.0):
        o, c, kh, kw = w.shape
        # (O,C,KH,KW) -> (KH,KW,C,O) -> (KH*KW*C, O): matches im2col column order.
        w = (w * scale).transpose(2, 3, 1, 0).reshape(kh * kw * c, o)
        return w.astype(jnp.bfloat16)

    oh, ow = _conv_out_hw(input_shape)
    conv_out = 64 * oh * ow

    p = {}
    p["c1_w"] = conv_w(params["c1_w"], scale=1.0 / 256.0)  # /256 folded into w1
    p["c2_w"] = conv_w(params["c2_w"])
    p["c3_w"] = conv_w(params["c3_w"])
    p["c1_b"] = params["c1_b"].reshape(1, -1).astype(jnp.float32)
    p["c2_b"] = params["c2_b"].reshape(1, -1).astype(jnp.float32)
    p["c3_b"] = params["c3_b"].reshape(1, -1).astype(jnp.float32)

    # fc1: permute columns from PyTorch's NCHW-flatten order to our NHWC order,
    # then transpose once to (conv_out, 512).
    f1 = params["f1_w"].reshape(512, 64, oh, ow).transpose(0, 2, 3, 1)
    p["f1_w"] = f1.reshape(512, conv_out).T.astype(jnp.bfloat16)
    p["f1_b"] = params["f1_b"].reshape(1, -1).astype(jnp.float32)

    # fc2: (n_actions, 512) -> (512, 128) zero-padded for lane-dense stores.
    n_pad = 128
    f2 = jnp.zeros((512, n_pad), jnp.float32).at[:, :n_actions].set(
        params["f2_w"].T)
    p["f2_w"] = f2.astype(jnp.bfloat16)
    p["f2_b"] = jnp.zeros((1, n_pad), jnp.float32).at[0, :n_actions].set(
        params["f2_b"])
    return p


# ----------------------------------------------------------------------------
# Forward
# ----------------------------------------------------------------------------
@functools.partial(jax.jit, static_argnames=("n_actions",))
def net_forward(p, x, *, n_actions):
    """x: (N, C, H, W) uint8 (or any int/float).  Returns (N, n_actions) f32."""
    # NCHW -> NHWC once; uint8 values 0..255 are exact in bf16.  The /256 is
    # folded into the conv1 weights, so the bf16 activations stay exact here.
    fx = jnp.transpose(x, (0, 2, 3, 1)).astype(jnp.bfloat16)
    h = conv2d_nhwc(fx, p["c1_w"], p["c1_b"], stride=4, kh=8, kw=8)
    h = conv2d_nhwc(h, p["c2_w"], p["c2_b"], stride=2, kh=4, kw=4)
    h = conv2d_nhwc(h, p["c3_w"], p["c3_b"], stride=1, kh=3, kw=3)
    flat = h.reshape(h.shape[0], -1)                    # NHWC flatten (fc1 pre-permuted)
    out = fc_head(flat, p["f1_w"], p["f1_b"], p["f2_w"], p["f2_b"])
    return out[:, :n_actions]


# Plain-JAX f32 reference (mirrors the PyTorch module exactly) for validation.
def net_reference(params, x):
    fx = x.astype(jnp.float32) / 256.0

    def conv(h, w, b, s):
        y = lax.conv_general_dilated(
            h, w, (s, s), "VALID",
            dimension_numbers=("NCHW", "OIHW", "NCHW"))
        return jnp.maximum(y + b.reshape(1, -1, 1, 1), 0.0)

    h = conv(fx, params["c1_w"], params["c1_b"], 4)
    h = conv(h, params["c2_w"], params["c2_b"], 2)
    h = conv(h, params["c3_w"], params["c3_b"], 1)
    flat = h.reshape(h.shape[0], -1)
    h = jnp.maximum(flat @ params["f1_w"].T + params["f1_b"], 0.0)
    return h @ params["f2_w"].T + params["f2_b"]


if __name__ == "__main__":
    # Smallest valid spatial size for this conv stack: 36x36 -> 8 -> 3 -> 1.
    batch, channels, height, width = 2, 4, 36, 36
    n_actions = 2

    key = jax.random.PRNGKey(0)
    k_params, k_x = jax.random.split(key)

    params = init_params(k_params, (channels, height, width), n_actions)
    prepped = prepare_params(params, (channels, height, width), n_actions)

    x = jax.random.randint(k_x, (batch, channels, height, width), 0, 256,
                           dtype=jnp.int32).astype(jnp.uint8)

    out = net_forward(prepped, x, n_actions=n_actions)
    out = jax.block_until_ready(out)
    assert out.shape == (batch, n_actions), out.shape
    assert out.dtype == jnp.float32

    # Correctness vs the f32 PyTorch-equivalent reference (bf16-level tolerance).
    ref = net_reference(params, x)
    err = float(jnp.max(jnp.abs(out - ref)))
    assert err < 1e-1, f"max abs error {err}"

    print("KERNEL_OK")
</pallas_src>

<mosaic_0001>
module attributes {stable_mosaic.version = 11 : i64} {
  func.func @_gemm_bias_kernel(%arg0: i32, %arg1: memref<128x256xbf16, #tpu.memory_space<vmem>>, %arg2: memref<256x32xbf16, #tpu.memory_space<vmem>>, %arg3: memref<1x32xf32, #tpu.memory_space<vmem>>, %arg4: memref<128x32xbf16, #tpu.memory_space<vmem>>) attributes {dimension_semantics = [#tpu.dimension_semantics<parallel>], iteration_bounds = array<i64: 1>, scalar_prefetch = 0 : i64, scratch_operands = 0 : i64, tpu.core_type = #tpu.core_type<tc>, window_params = [{transform_indices = @transform_0, window_bounds = array<i64: 128, 256>}, {pipeline_mode = #tpu.pipeline_mode<synchronous>, transform_indices = @transform_1, window_bounds = array<i64: 256, 32>}, {pipeline_mode = #tpu.pipeline_mode<synchronous>, transform_indices = @transform_2, window_bounds = array<i64: 1, 32>}, {transform_indices = @transform_3, window_bounds = array<i64: 128, 32>}]} {
    %c0 = arith.constant 0 : index
    %c0_0 = arith.constant 0 : index
    %0 = vector.load %arg1[%c0, %c0_0] : memref<128x256xbf16, #tpu.memory_space<vmem>>, vector<128x256xbf16>
    %c0_1 = arith.constant 0 : index
    %c0_2 = arith.constant 0 : index
    %1 = vector.load %arg2[%c0_1, %c0_2] : memref<256x32xbf16, #tpu.memory_space<vmem>>, vector<256x32xbf16>
    %cst = arith.constant dense<0.000000e+00> : vector<128x32xf32>
    %2 = tpu.matmul %0, %1, %cst {dimension_numbers = #tpu.dot_dimension_numbers<[1], [0], [0], [1], [0, 0, 1, 1], [], []>} : vector<128x256xbf16>, vector<256x32xbf16>, vector<128x32xf32> -> vector<128x32xf32>
    %c0_3 = arith.constant 0 : index
    %c0_4 = arith.constant 0 : index
    %3 = vector.load %arg3[%c0_3, %c0_4] : memref<1x32xf32, #tpu.memory_space<vmem>>, vector<1x32xf32>
    %4 = vector.broadcast %3 : vector<1x32xf32> to vector<128x32xf32>
    %5 = arith.addf %2, %4 : vector<128x32xf32>
    %cst_5 = arith.constant 0.000000e+00 : f32
    %6 = vector.broadcast %cst_5 : f32 to vector<128x32xf32>
    %7 = arith.maximumf %5, %6 : vector<128x32xf32>
    %8 = arith.truncf %7 : vector<128x32xf32> to vector<128x32xbf16>
    %c0_6 = arith.constant 0 : index
    %c0_7 = arith.constant 0 : index
    %9 = vector.load %arg4[%c0_6, %c0_7] : memref<128x32xbf16, #tpu.memory_space<vmem>>, vector<128x32xbf16>
    tpu.vector_store %arg4[%c0_6, %c0_7], %8 {strides = array<i32>} : memref<128x32xbf16, #tpu.memory_space<vmem>>, vector<128x32xbf16>,
    return
  }
  func.func @transform_0(%arg0: i32) -> (i32, i32) {
    %c0_i32 = arith.constant 0 : i32
    %c0_i32_0 = arith.constant 0 : i32
    return %arg0, %c0_i32 : i32, i32
  }
  func.func @transform_1(%arg0: i32) -> (i32, i32) {
    %c0_i32 = arith.constant 0 : i32
    %c0_i32_0 = arith.constant 0 : i32
    %c0_i32_1 = arith.constant 0 : i32
    return %c0_i32, %c0_i32_0 : i32, i32
  }
  func.func @transform_2(%arg0: i32) -> (i32, i32) {
    %c0_i32 = arith.constant 0 : i32
    %c0_i32_0 = arith.constant 0 : i32
    %c0_i32_1 = arith.constant 0 : i32
    return %c0_i32, %c0_i32_0 : i32, i32
  }
  func.func @transform_3(%arg0: i32) -> (i32, i32) {
    %c0_i32 = arith.constant 0 : i32
    %c0_i32_0 = arith.constant 0 : i32
    return %arg0, %c0_i32 : i32, i32
  }
}

module attributes {stable_mosaic.version = 11 : i64} {
  func.func @_gemm_bias_kernel(%arg0: i32, %arg1: memref<18x512xbf16, #tpu.memory_space<vmem>>, %arg2: memref<512x64xbf16, #tpu.memory_space<vmem>>, %arg3: memref<1x64xf32, #tpu.memory_space<vmem>>, %arg4: memref<18x64xbf16, #tpu.memory_space<vmem>>) attributes {dimension_semantics = [#tpu.dimension_semantics<parallel>], iteration_bounds = array<i64: 1>, scalar_prefetch = 0 : i64, scratch_operands = 0 : i64, tpu.core_type = #tpu.core_type<tc>, window_params = [{transform_indices = @transform_0, window_bounds = array<i64: 18, 512>}, {pipeline_mode = #tpu.pipeline_mode<synchronous>, transform_indices = @transform_1, window_bounds = array<i64: 512, 64>}, {pipeline_mode = #tpu.pipeline_mode<synchronous>, transform_indices = @transform_2, window_bounds = array<i64: 1, 64>}, {transform_indices = @transform_3, window_bounds = array<i64: 18, 64>}]} {
    %c0 = arith.constant 0 : index
    %c0_0 = arith.constant 0 : index
    %0 = vector.load %arg1[%c0, %c0_0] : memref<18x512xbf16, #tpu.memory_space<vmem>>, vector<18x512xbf16>
    %c0_1 = arith.constant 0 : index
    %c0_2 = arith.constant 0 : index
    %1 = vector.load %arg2[%c0_1, %c0_2] : memref<512x64xbf16, #tpu.memory_space<vmem>>, vector<512x64xbf16>
    %cst = arith.constant dense<0.000000e+00> : vector<18x64xf32>
    %2 = tpu.matmul %0, %1, %cst {dimension_numbers = #tpu.dot_dimension_numbers<[1], [0], [0], [1], [0, 0, 1, 1], [], []>} : vector<18x512xbf16>, vector<512x64xbf16>, vector<18x64xf32> -> vector<18x64xf32>
    %c0_3 = arith.constant 0 : index
    %c0_4 = arith.constant 0 : index
    %3 = vector.load %arg3[%c0_3, %c0_4] : memref<1x64xf32, #tpu.memory_space<vmem>>, vector<1x64xf32>
    %4 = vector.broadcast %3 : vector<1x64xf32> to vector<18x64xf32>
    %5 = arith.addf %2, %4 : vector<18x64xf32>
    %cst_5 = arith.constant 0.000000e+00 : f32
    %6 = vector.broadcast %cst_5 : f32 to vector<18x64xf32>
    %7 = arith.maximumf %5, %6 : vector<18x64xf32>
    %8 = arith.truncf %7 : vector<18x64xf32> to vector<18x64xbf16>
    %c0_6 = arith.constant 0 : index
    %c0_7 = arith.constant 0 : index
    %9 = vector.load %arg4[%c0_6, %c0_7] : memref<18x64xbf16, #tpu.memory_space<vmem>>, vector<18x64xbf16>
    tpu.vector_store %arg4[%c0_6, %c0_7], %8 {strides = array<i32>} : memref<18x64xbf16, #tpu.memory_space<vmem>>, vector<18x64xbf16>,
    return
  }
  func.func @transform_0(%arg0: i32) -> (i32, i32) {
    %c0_i32 = arith.constant 0 : i32
    %c0_i32_0 = arith.constant 0 : i32
    return %arg0, %c0_i32 : i32, i32
  }
  func.func @transform_1(%arg0: i32) -> (i32, i32) {
    %c0_i32 = arith.constant 0 : i32
    %c0_i32_0 = arith.constant 0 : i32
    %c0_i32_1 = arith.constant 0 : i32
    return %c0_i32, %c0_i32_0 : i32, i32
  }
  func.func @transform_2(%arg0: i32) -> (i32, i32) {
    %c0_i32 = arith.constant 0 : i32
    %c0_i32_0 = arith.constant 0 : i32
    %c0_i32_1 = arith.constant 0 : i32
    return %c0_i32, %c0_i32_0 : i32, i32
  }
  func.func @transform_3(%arg0: i32) -> (i32, i32) {
    %c0_i32 = arith.constant 0 : i32
    %c0_i32_0 = arith.constant 0 : i32
    return %arg0, %c0_i32 : i32, i32
  }
}

module attributes {stable_mosaic.version = 11 : i64} {
  func.func @_gemm_bias_kernel(%arg0: i32, %arg1: memref<2x576xbf16, #tpu.memory_space<vmem>>, %arg2: memref<576x64xbf16, #tpu.memory_space<vmem>>, %arg3: memref<1x64xf32, #tpu.memory_space<vmem>>, %arg4: memref<2x64xbf16, #tpu.memory_space<vmem>>) attributes {dimension_semantics = [#tpu.dimension_semantics<parallel>], iteration_bounds = array<i64: 1>, scalar_prefetch = 0 : i64, scratch_operands = 0 : i64, tpu.core_type = #tpu.core_type<tc>, window_params = [{transform_indices = @transform_0, window_bounds = array<i64: 2, 576>}, {pipeline_mode = #tpu.pipeline_mode<synchronous>, transform_indices = @transform_1, window_bounds = array<i64: 576, 64>}, {pipeline_mode = #tpu.pipeline_mode<synchronous>, transform_indices = @transform_2, window_bounds = array<i64: 1, 64>}, {transform_indices = @transform_3, window_bounds = array<i64: 2, 64>}]} {
    %c0 = arith.constant 0 : index
    %c0_0 = arith.constant 0 : index
    %0 = vector.load %arg1[%c0, %c0_0] : memref<2x576xbf16, #tpu.memory_space<vmem>>, vector<2x576xbf16>
    %c0_1 = arith.constant 0 : index
    %c0_2 = arith.constant 0 : index
    %1 = vector.load %arg2[%c0_1, %c0_2] : memref<576x64xbf16, #tpu.memory_space<vmem>>, vector<576x64xbf16>
    %cst = arith.constant dense<0.000000e+00> : vector<2x64xf32>
    %2 = tpu.matmul %0, %1, %cst {dimension_numbers = #tpu.dot_dimension_numbers<[1], [0], [0], [1], [0, 0, 1, 1], [], []>} : vector<2x576xbf16>, vector<576x64xbf16>, vector<2x64xf32> -> vector<2x64xf32>
    %c0_3 = arith.constant 0 : index
    %c0_4 = arith.constant 0 : index
    %3 = vector.load %arg3[%c0_3, %c0_4] : memref<1x64xf32, #tpu.memory_space<vmem>>, vector<1x64xf32>
    %4 = vector.broadcast %3 : vector<1x64xf32> to vector<2x64xf32>
    %5 = arith.addf %2, %4 : vector<2x64xf32>
    %cst_5 = arith.constant 0.000000e+00 : f32
    %6 = vector.broadcast %cst_5 : f32 to vector<2x64xf32>
    %7 = arith.maximumf %5, %6 : vector<2x64xf32>
    %8 = arith.truncf %7 : vector<2x64xf32> to vector<2x64xbf16>
    %c0_6 = arith.constant 0 : index
    %c0_7 = arith.constant 0 : index
    %9 = vector.load %arg4[%c0_6, %c0_7] : memref<2x64xbf16, #tpu.memory_space<vmem>>, vector<2x64xbf16>
    tpu.vector_store %arg4[%c0_6, %c0_7], %8 {strides = array<i32>} : memref<2x64xbf16, #tpu.memory_space<vmem>>, vector<2x64xbf16>,
    return
  }
  func.func @transform_0(%arg0: i32) -> (i32, i32) {
    %c0_i32 = arith.constant 0 : i32
    %c0_i32_0 = arith.constant 0 : i32
    return %arg0, %c0_i32 : i32, i32
  }
  func.func @transform_1(%arg0: i32) -> (i32, i32) {
    %c0_i32 = arith.constant 0 : i32
    %c0_i32_0 = arith.constant 0 : i32
    %c0_i32_1 = arith.constant 0 : i32
    return %c0_i32, %c0_i32_0 : i32, i32
  }
  func.func @transform_2(%arg0: i32) -> (i32, i32) {
    %c0_i32 = arith.constant 0 : i32
    %c0_i32_0 = arith.constant 0 : i32
    %c0_i32_1 = arith.constant 0 : i32
    return %c0_i32, %c0_i32_0 : i32, i32
  }
  func.func @transform_3(%arg0: i32) -> (i32, i32) {
    %c0_i32 = arith.constant 0 : i32
    %c0_i32_0 = arith.constant 0 : i32
    return %arg0, %c0_i32 : i32, i32
  }
}

module attributes {stable_mosaic.version = 11 : i64} {
  func.func @_fc_head_kernel(%arg0: i32, %arg1: memref<2x64xbf16, #tpu.memory_space<vmem>>, %arg2: memref<64x512xbf16, #tpu.memory_space<vmem>>, %arg3: memref<1x512xf32, #tpu.memory_space<vmem>>, %arg4: memref<512x128xbf16, #tpu.memory_space<vmem>>, %arg5: memref<1x128xf32, #tpu.memory_space<vmem>>, %arg6: memref<2x128xf32, #tpu.memory_space<vmem>>) attributes {dimension_semantics = [#tpu.dimension_semantics<parallel>], iteration_bounds = array<i64: 1>, scalar_prefetch = 0 : i64, scratch_operands = 0 : i64, tpu.core_type = #tpu.core_type<tc>, window_params = [{transform_indices = @transform_0, window_bounds = array<i64: 2, 64>}, {pipeline_mode = #tpu.pipeline_mode<synchronous>, transform_indices = @transform_1, window_bounds = array<i64: 64, 512>}, {pipeline_mode = #tpu.pipeline_mode<synchronous>, transform_indices = @transform_2, window_bounds = array<i64: 1, 512>}, {pipeline_mode = #tpu.pipeline_mode<synchronous>, transform_indices = @transform_3, window_bounds = array<i64: 512, 128>}, {pipeline_mode = #tpu.pipeline_mode<synchronous>, transform_indices = @transform_4, window_bounds = array<i64: 1, 128>}, {transform_indices = @transform_5, window_bounds = array<i64: 2, 128>}]} {
    %c0 = arith.constant 0 : index
    %c0_0 = arith.constant 0 : index
    %0 = vector.load %arg1[%c0, %c0_0] : memref<2x64xbf16, #tpu.memory_space<vmem>>, vector<2x64xbf16>
    %c0_1 = arith.constant 0 : index
    %c0_2 = arith.constant 0 : index
    %1 = vector.load %arg2[%c0_1, %c0_2] : memref<64x512xbf16, #tpu.memory_space<vmem>>, vector<64x512xbf16>
    %cst = arith.constant dense<0.000000e+00> : vector<2x512xf32>
    %2 = tpu.matmul %0, %1, %cst {dimension_numbers = #tpu.dot_dimension_numbers<[1], [0], [0], [1], [0, 0, 1, 1], [], []>} : vector<2x64xbf16>, vector<64x512xbf16>, vector<2x512xf32> -> vector<2x512xf32>
    %c0_3 = arith.constant 0 : index
    %c0_4 = arith.constant 0 : index
    %3 = vector.load %arg3[%c0_3, %c0_4] : memref<1x512xf32, #tpu.memory_space<vmem>>, vector<1x512xf32>
    %4 = vector.broadcast %3 : vector<1x512xf32> to vector<2x512xf32>
    %5 = arith.addf %2, %4 : vector<2x512xf32>
    %cst_5 = arith.constant 0.000000e+00 : f32
    %6 = vector.broadcast %cst_5 : f32 to vector<2x512xf32>
    %7 = arith.maximumf %5, %6 : vector<2x512xf32>
    %8 = arith.truncf %7 : vector<2x512xf32> to vector<2x512xbf16>
    %c0_6 = arith.constant 0 : index
    %c0_7 = arith.constant 0 : index
    %9 = vector.load %arg4[%c0_6, %c0_7] : memref<512x128xbf16, #tpu.memory_space<vmem>>, vector<512x128xbf16>
    %cst_8 = arith.constant dense<0.000000e+00> : vector<2x128xf32>
    %10 = tpu.matmul %8, %9, %cst_8 {dimension_numbers = #tpu.dot_dimension_numbers<[1], [0], [0], [1], [0, 0, 1, 1], [], []>} : vector<2x512xbf16>, vector<512x128xbf16>, vector<2x128xf32> -> vector<2x128xf32>
    %c0_9 = arith.constant 0 : index
    %c0_10 = arith.constant 0 : index
    %11 = vector.load %arg5[%c0_9, %c0_10] : memref<1x128xf32, #tpu.memory_space<vmem>>, vector<1x128xf32>
    %12 = vector.broadcast %11 : vector<1x128xf32> to vector<2x128xf32>
    %13 = arith.addf %10, %12 : vector<2x128xf32>
    %c0_11 = arith.constant 0 : index
    %c0_12 = arith.constant 0 : index
    %14 = vector.load %arg6[%c0_11, %c0_12] : memref<2x128xf32, #tpu.memory_space<vmem>>, vector<2x128xf32>
    tpu.vector_store %arg6[%c0_11, %c0_12], %13 {strides = array<i32>} : memref<2x128xf32, #tpu.memory_space<vmem>>, vector<2x128xf32>,
    return
  }
  func.func @transform_0(%arg0: i32) -> (i32, i32) {
    %c0_i32 = arith.constant 0 : i32
    %c0_i32_0 = arith.constant 0 : i32
    return %arg0, %c0_i32 : i32, i32
  }
  func.func @transform_1(%arg0: i32) -> (i32, i32) {
    %c0_i32 = arith.constant 0 : i32
    %c0_i32_0 = arith.constant 0 : i32
    %c0_i32_1 = arith.constant 0 : i32
    return %c0_i32, %c0_i32_0 : i32, i32
  }
  func.func @transform_2(%arg0: i32) -> (i32, i32) {
    %c0_i32 = arith.constant 0 : i32
    %c0_i32_0 = arith.constant 0 : i32
    %c0_i32_1 = arith.constant 0 : i32
    return %c0_i32, %c0_i32_0 : i32, i32
  }
  func.func @transform_3(%arg0: i32) -> (i32, i32) {
    %c0_i32 = arith.constant 0 : i32
    %c0_i32_0 = arith.constant 0 : i32
    %c0_i32_1 = arith.constant 0 : i32
    return %c0_i32, %c0_i32_0 : i32, i32
  }
  func.func @transform_4(%arg0: i32) -> (i32, i32) {
    %c0_i32 = arith.constant 0 : i32
    %c0_i32_0 = arith.constant 0 : i32
    %c0_i32_1 = arith.constant 0 : i32
    return %c0_i32, %c0_i32_0 : i32, i32
  }
  func.func @transform_5(%arg0: i32) -> (i32, i32) {
    %c0_i32 = arith.constant 0 : i32
    %c0_i32_0 = arith.constant 0 : i32
    return %arg0, %c0_i32 : i32, i32
  }
}

</mosaic_0001>

<llo_original>
// kernel: net_forward.4
$region0: #{net_forward.4}
  #allocation0 [shape = 'u32[]', space=smem, size = 0x4, offset = 0x4, fixed_abs, tag = 'smem constant byte address 0x4 - core index']
  #allocation1 [shape = 'u32[144,128]{1,0:T(1,128)}', space=vmem, size = 0x12000, scoped, tag = 'internal scratch']
  %s0 = inlined_call_operand.vmem [shape: bf16[128,256], index: 0, kind: input, shape index: {}]
  %s1 = inlined_call_operand.vmem [shape: bf16[256,32], index: 1, kind: input, shape index: {}]
  %s2 = inlined_call_operand.vmem [shape: f32[1,32], index: 2, kind: input, shape index: {}]
  %s3 = inlined_call_operand.vmem [shape: bf16[128,32], index: 3, kind: output, shape index: {}]
  %s4 = sld [smem:[#allocation0]]
  $region22: #{net_forward.4} parent=0
    _
  %s6 = ssub.s32 1, %s4
  %s7 = scalar_select 0, %s6, %s4
  // Predicated region
  $region2: #{net_forward.4} parent=0 // pred_check
    _
  $region3: #{net_forward.4} parent=0 // pred_check_branch
    %9 = sbr.rel (0) target = $region5
  $region4: #{net_forward.4} parent=0 // pred_region
    _
  $region5: #{net_forward.4} parent=0 // pred_fallthru
    _
  // Predicated region
  $region6: #{net_forward.4} parent=0 // pred_check
    _
  $region7: #{net_forward.4} parent=0 // pred_check_branch
    %11 = sbr.rel (0) target = $region9
  $region8: #{net_forward.4} parent=0 // pred_region
    _
  $region9: #{net_forward.4} parent=0 // pred_fallthru
    _
  // Predicated region
  $region10: #{net_forward.4} parent=0 // pred_check
    _
  $region11: #{net_forward.4} parent=0 // pred_check_branch
    %13 = sbr.rel (0) target = $region13
  $region12: #{net_forward.4} parent=0 // pred_region
    _
  $region13: #{net_forward.4} parent=0 // pred_fallthru
    _
  %v15 = vld [vmem:[%s0] sm:$0xff]
  %v16 = vld [vmem:[%s0 + $0x8] sm:$0xff]
  %v17 = vld [vmem:[%s0 + $0x10] sm:$0xff]
  %v18 = vld [vmem:[%s0 + $0x18] sm:$0xff]
  %v19 = vld [vmem:[%s0 + $0x20] sm:$0xff]
  %v20 = vld [vmem:[%s0 + $0x28] sm:$0xff]
  %v21 = vld [vmem:[%s0 + $0x30] sm:$0xff]
  %v22 = vld [vmem:[%s0 + $0x38] sm:$0xff]
  %v23 = vld [vmem:[%s0 + $0x40] sm:$0xff]
  %v24 = vld [vmem:[%s0 + $0x48] sm:$0xff]
  %v25 = vld [vmem:[%s0 + $0x50] sm:$0xff]
  %v26 = vld [vmem:[%s0 + $0x58] sm:$0xff]
  %v27 = vld [vmem:[%s0 + $0x60] sm:$0xff]
  %v28 = vld [vmem:[%s0 + $0x68] sm:$0xff]
  %v29 = vld [vmem:[%s0 + $0x70] sm:$0xff]
  %v30 = vld [vmem:[%s0 + $0x78] sm:$0xff]
  %v31 = vld [vmem:[%s1] sm:$0xf]
  %v32 = vld [vmem:[%s1 + $0x4] sm:$0xf]
  %v33 = vld [vmem:[%s1 + $0x8] sm:$0xf]
  %v34 = vld [vmem:[%s1 + $0xc] sm:$0xf]
  %v35 = vld [vmem:[%s1 + $0x10] sm:$0xf]
  %v36 = vld [vmem:[%s1 + $0x14] sm:$0xf]
  %v37 = vld [vmem:[%s1 + $0x18] sm:$0xf]
  %v38 = vld [vmem:[%s1 + $0x1c] sm:$0xf]
  %v39 = vld [vmem:[%s1 + $0x20] sm:$0xf]
  %v40 = vld [vmem:[%s1 + $0x24] sm:$0xf]
  %v41 = vld [vmem:[%s1 + $0x28] sm:$0xf]
  %v42 = vld [vmem:[%s1 + $0x2c] sm:$0xf]
  %v43 = vld [vmem:[%s1 + $0x30] sm:$0xf]
  %v44 = vld [vmem:[%s1 + $0x34] sm:$0xf]
  %v45 = vld [vmem:[%s1 + $0x38] sm:$0xf]
  %v46 = vld [vmem:[%s1 + $0x3c] sm:$0xf]
  %v47 = vld [vmem:[%s1 + $0x40] sm:$0xf]
  %v48 = vld [vmem:[%s1 + $0x44] sm:$0xf]
  %v49 = vld [vmem:[%s1 + $0x48] sm:$0xf]
  %v50 = vld [vmem:[%s1 + $0x4c] sm:$0xf]
  %v51 = vld [vmem:[%s1 + $0x50] sm:$0xf]
  %v52 = vld [vmem:[%s1 + $0x54] sm:$0xf]
  %v53 = vld [vmem:[%s1 + $0x58] sm:$0xf]
  %v54 = vld [vmem:[%s1 + $0x5c] sm:$0xf]
  %v55 = vld [vmem:[%s1 + $0x60] sm:$0xf]
  %v56 = vld [vmem:[%s1 + $0x64] sm:$0xf]
  %v57 = vld [vmem:[%s1 + $0x68] sm:$0xf]
  %v58 = vld [vmem:[%s1 + $0x6c] sm:$0xf]
  %v59 = vld [vmem:[%s1 + $0x70] sm:$0xf]
  %v60 = vld [vmem:[%s1 + $0x74] sm:$0xf]
  %v61 = vld [vmem:[%s1 + $0x78] sm:$0xf]
  %v62 = vld [vmem:[%s1 + $0x7c] sm:$0xf]
  %v63 = vld [vmem:[%s2] sm:$0x1]
  %v65 = vlaneseq
  %v66 = vshrl.u32 %v65, 7
  %v67 = vsub.s32 0, %v66
  %v68 = vrot.slane %v63, %v67
  %v86 = vunpack.c.l.b16 %v15
  %v87 = vunpack.c.h.b16 %v15
  %v88 = vunpack.c.l.b16 %v16
  %v89 = vunpack.c.h.b16 %v16
  %v90 = vunpack.c.l.b16 %v17
  %v91 = vunpack.c.h.b16 %v17
  %v92 = vunpack.c.l.b16 %v18
  %v93 = vunpack.c.h.b16 %v18
  %v94 = vunpack.c.l.b16 %v19
  %v95 = vunpack.c.h.b16 %v19
  %v96 = vunpack.c.l.b16 %v20
  %v97 = vunpack.c.h.b16 %v20
  %v98 = vunpack.c.l.b16 %v21
  %v99 = vunpack.c.h.b16 %v21
  %v100 = vunpack.c.l.b16 %v22
  %v101 = vunpack.c.h.b16 %v22
  %v102 = vunpack.c.l.b16 %v23
  %v103 = vunpack.c.h.b16 %v23
  %v104 = vunpack.c.l.b16 %v24
  %v105 = vunpack.c.h.b16 %v24
  %v106 = vunpack.c.l.b16 %v25
  %v107 = vunpack.c.h.b16 %v25
  %v108 = vunpack.c.l.b16 %v26
  %v109 = vunpack.c.h.b16 %v26
  %v110 = vunpack.c.l.b16 %v27
  %v111 = vunpack.c.h.b16 %v27
  %v112 = vunpack.c.l.b16 %v28
  %v113 = vunpack.c.h.b16 %v28
  %v114 = vunpack.c.l.b16 %v29
  %v115 = vunpack.c.h.b16 %v29
  %v116 = vunpack.c.l.b16 %v30
  %v117 = vunpack.c.h.b16 %v30
  %v118 = vpack.c.b16 %v88, %v86
  %v119 = vpack.c.b16 %v89, %v87
  %v120 = vpack.c.b16 %v92, %v90
  %v121 = vpack.c.b16 %v93, %v91
  %v122 = vpack.c.b16 %v96, %v94
  %v123 = vpack.c.b16 %v97, %v95
  %v124 = vpack.c.b16 %v100, %v98
  %v125 = vpack.c.b16 %v101, %v99
  %v126 = vpack.c.b16 %v104, %v102
  %v127 = vpack.c.b16 %v105, %v103
  %v128 = vpack.c.b16 %v108, %v106
  %v129 = vpack.c.b16 %v109, %v107
  %v130 = vpack.c.b16 %v112, %v110
  %v131 = vpack.c.b16 %v113, %v111
  %v132 = vpack.c.b16 %v116, %v114
  %v133 = vpack.c.b16 %v117, %v115
  %v182 = vunpack.c.l.b16 %v31
  %v183 = vunpack.c.l.b16 %v32
  %v184 = vunpack.c.l.b16 %v33
  %v185 = vunpack.c.l.b16 %v34
  %v186 = vunpack.c.l.b16 %v35
  %v187 = vunpack.c.l.b16 %v36
  %v188 = vunpack.c.l.b16 %v37
  %v189 = vunpack.c.l.b16 %v38
  %v190 = vunpack.c.l.b16 %v39
  %v191 = vunpack.c.l.b16 %v40
  %v192 = vunpack.c.l.b16 %v41
  %v193 = vunpack.c.l.b16 %v42
  %v194 = vunpack.c.l.b16 %v43
  %v195 = vunpack.c.l.b16 %v44
  %v196 = vunpack.c.l.b16 %v45
  %v197 = vunpack.c.l.b16 %v46
  %v198 = vunpack.c.l.b16 %v47
  %v199 = vunpack.c.l.b16 %v48
  %v200 = vunpack.c.l.b16 %v49
  %v201 = vunpack.c.l.b16 %v50
  %v202 = vunpack.c.l.b16 %v51
  %v203 = vunpack.c.l.b16 %v52
  %v204 = vunpack.c.l.b16 %v53
  %v205 = vunpack.c.l.b16 %v54
  %v206 = vunpack.c.l.b16 %v55
  %v207 = vunpack.c.l.b16 %v56
  %v208 = vunpack.c.l.b16 %v57
  %v209 = vunpack.c.l.b16 %v58
  %v210 = vunpack.c.l.b16 %v59
  %v211 = vunpack.c.l.b16 %v60
  %v212 = vunpack.c.l.b16 %v61
  %v213 = vunpack.c.l.b16 %v62
  %v214 = vpack.c.b16 %v183, %v182
  %v215 = vpack.c.b16 %v185, %v184
  %v216 = vpack.c.b16 %v187, %v186
  %v217 = vpack.c.b16 %v189, %v188
  %v218 = vpack.c.b16 %v191, %v190
  %v219 = vpack.c.b16 %v193, %v192
  %v220 = vpack.c.b16 %v195, %v194
  %v221 = vpack.c.b16 %v197, %v196
  %v222 = vpack.c.b16 %v199, %v198
  %v223 = vpack.c.b16 %v201, %v200
  %v224 = vpack.c.b16 %v203, %v202
  %v225 = vpack.c.b16 %v205, %v204
  %v226 = vpack.c.b16 %v207, %v206
  %v227 = vpack.c.b16 %v209, %v208
  %v228 = vpack.c.b16 %v211, %v210
  %v229 = vpack.c.b16 %v213, %v212
  %246 = vmatprep.subr.bf16.mxu0 0
  %247 = vmatpush1.bf16.msra.mxu0 %v214
  %248 = vmatprep.subr.bf16.mxu0 0
  %249 = vmatpush1.bf16.msra.mxu0 %v215
  %250 = vmatprep.subr.bf16.mxu0 0
  %251 = vmatpush1.bf16.msra.mxu0 %v216
  %252 = vmatprep.subr.bf16.mxu0 0
  %253 = vmatpush1.bf16.msra.mxu0 %v217
  %254 = vmatprep.subr.bf16.mxu0 0
  %255 = vmatpush1.bf16.msra.mxu0 %v218
  %256 = vmatprep.subr.bf16.mxu0 0
  %257 = vmatpush1.bf16.msra.mxu0 %v219
  %258 = vmatprep.subr.bf16.mxu0 0
  %259 = vmatpush1.bf16.msra.mxu0 %v220
  %260 = vmatprep.subr.bf16.mxu0 0
  %261 = vmatpush1.bf16.msra.mxu0 %v221
  %262 = vmatprep.subr.bf16.mxu0 0
  %263 = vmatpush1.bf16.msra.mxu0 %v222
  %264 = vmatprep.subr.bf16.mxu0 0
  %265 = vmatpush1.bf16.msra.mxu0 %v223
  %266 = vmatprep.subr.bf16.mxu0 0
  %267 = vmatpush1.bf16.msra.mxu0 %v224
  %268 = vmatprep.subr.bf16.mxu0 0
  %269 = vmatpush1.bf16.msra.mxu0 %v225
  %270 = vmatprep.subr.bf16.mxu0 0
  %271 = vmatpush1.bf16.msra.mxu0 %v226
  %272 = vmatprep.subr.bf16.mxu0 0
  %273 = vmatpush1.bf16.msra.mxu0 %v227
  %274 = vmatprep.subr.bf16.mxu0 0
  %275 = vmatpush1.bf16.msra.mxu0 %v228
  %276 = vmatprep.subr.bf16.mxu0 0
  %277 = vmatpush1.bf16.msra.mxu0 %v229
  %278 = vmatprep.mubr.bf16.mxu0 %v119
  %279 = vmatmul.mubr.bf16.gmra.mrb[0].mxu0 %v118
  %v280 = vpop.f32.mrb[0].mxu0
  %v281 = vadd.f32 %v68, %v280
  %v282 = vpop.f32.mrb[0].mxu0
  %v283 = vpop.f32.mrb[0].mxu0
  %v284 = vadd.f32 %v68, %v283
  %v285 = vpop.f32.mrb[0].mxu0
  %286 = vmatprep.mubr.bf16.mxu0 %v121
  %287 = vmatmul.mubr.bf16.gmra.mrb[0].mxu0 %v120
  %v288 = vpop.f32.mrb[0].mxu0
  %v289 = vadd.f32 %v68, %v288
  %v290 = vpop.f32.mrb[0].mxu0
  %v291 = vpop.f32.mrb[0].mxu0
  %v292 = vadd.f32 %v68, %v291
  %v293 = vpop.f32.mrb[0].mxu0
  %294 = vmatprep.mubr.bf16.mxu0 %v123
  %295 = vmatmul.mubr.bf16.gmra.mrb[0].mxu0 %v122
  %v296 = vpop.f32.mrb[0].mxu0
  %v297 = vadd.f32 %v68, %v296
  %v298 = vpop.f32.mrb[0].mxu0
  %v299 = vpop.f32.mrb[0].mxu0
  %v300 = vadd.f32 %v68, %v299
  %v301 = vpop.f32.mrb[0].mxu0
  %302 = vmatprep.mubr.bf16.mxu0 %v125
  %303 = vmatmul.mubr.bf16.gmra.mrb[0].mxu0 %v124
  %v304 = vpop.f32.mrb[0].mxu0
  %v305 = vadd.f32 %v68, %v304
  %v306 = vpop.f32.mrb[0].mxu0
  %v307 = vpop.f32.mrb[0].mxu0
  %v308 = vadd.f32 %v68, %v307
  %v309 = vpop.f32.mrb[0].mxu0
  %310 = vmatprep.mubr.bf16.mxu0 %v127
  %311 = vmatmul.mubr.bf16.gmra.mrb[0].mxu0 %v126
  %v312 = vpop.f32.mrb[0].mxu0
  %v313 = vadd.f32 %v68, %v312
  %v314 = vpop.f32.mrb[0].mxu0
  %v315 = vpop.f32.mrb[0].mxu0
  %v316 = vadd.f32 %v68, %v315
  %v317 = vpop.f32.mrb[0].mxu0
  %318 = vmatprep.mubr.bf16.mxu0 %v129
  %319 = vmatmul.mubr.bf16.gmra.mrb[0].mxu0 %v128
  %v320 = vpop.f32.mrb[0].mxu0
  %v321 = vadd.f32 %v68, %v320
  %v322 = vpop.f32.mrb[0].mxu0
  %v323 = vpop.f32.mrb[0].mxu0
  %v324 = vadd.f32 %v68, %v323
  %v325 = vpop.f32.mrb[0].mxu0
  %326 = vmatprep.mubr.bf16.mxu0 %v131
  %327 = vmatmul.mubr.bf16.gmra.mrb[0].mxu0 %v130
  %v328 = vpop.f32.mrb[0].mxu0
  %v329 = vadd.f32 %v68, %v328
  %v330 = vpop.f32.mrb[0].mxu0
  %v331 = vpop.f32.mrb[0].mxu0
  %v332 = vadd.f32 %v68, %v331
  %v333 = vpop.f32.mrb[0].mxu0
  %334 = vmatprep.mubr.bf16.mxu0 %v133
  %335 = vmatmul.mubr.bf16.gmra.mrb[0].mxu0 %v132
  %v336 = vpop.f32.mrb[0].mxu0
  %v337 = vadd.f32 %v68, %v336
  %v338 = vpop.f32.mrb[0].mxu0
  %v339 = vpop.f32.mrb[0].mxu0
  %v340 = vadd.f32 %v68, %v339
  %v341 = vpop.f32.mrb[0].mxu0
  %342 = vdwg.mxu0
  %v343 = vmax.f32 %v281, 0.0
  %v344 = vmax.f32 %v284, 0.0
  %v345 = vmax.f32 %v289, 0.0
  %v346 = vmax.f32 %v292, 0.0
  %v347 = vmax.f32 %v297, 0.0
  %v348 = vmax.f32 %v300, 0.0
  %v349 = vmax.f32 %v305, 0.0
  %v350 = vmax.f32 %v308, 0.0
  %v351 = vmax.f32 %v313, 0.0
  %v352 = vmax.f32 %v316, 0.0
  %v353 = vmax.f32 %v321, 0.0
  %v354 = vmax.f32 %v324, 0.0
  %v355 = vmax.f32 %v329, 0.0
  %v356 = vmax.f32 %v332, 0.0
  %v357 = vmax.f32 %v337, 0.0
  %v358 = vmax.f32 %v340, 0.0
  %v359 = vpack.c.bf16 %v344, %v343
  %v360 = vpack.c.bf16 %v346, %v345
  %v361 = vpack.c.bf16 %v348, %v347
  %v362 = vpack.c.bf16 %v350, %v349
  %v363 = vpack.c.bf16 %v352, %v351
  %v364 = vpack.c.bf16 %v354, %v353
  %v365 = vpack.c.bf16 %v356, %v355
  %v366 = vpack.c.bf16 %v358, %v357
  %v375 = vunpack.c.l.b16 %v359
  %v376 = vunpack.c.h.b16 %v359
  %v377 = vunpack.c.l.b16 %v360
  %v378 = vunpack.c.h.b16 %v360
  %v379 = vunpack.c.l.b16 %v361
  %v380 = vunpack.c.h.b16 %v361
  %v381 = vunpack.c.l.b16 %v362
  %v382 = vunpack.c.h.b16 %v362
  %v383 = vunpack.c.l.b16 %v363
  %v384 = vunpack.c.h.b16 %v363
  %v385 = vunpack.c.l.b16 %v364
  %v386 = vunpack.c.h.b16 %v364
  %v387 = vunpack.c.l.b16 %v365
  %v388 = vunpack.c.h.b16 %v365
  %v389 = vunpack.c.l.b16 %v366
  %v390 = vunpack.c.h.b16 %v366
  %v391 = vpack.c.b16 %v375, %v375
  %v392 = vpack.c.b16 %v376, %v376
  %v393 = vpack.c.b16 %v377, %v377
  %v394 = vpack.c.b16 %v378, %v378
  %v395 = vpack.c.b16 %v379, %v379
  %v396 = vpack.c.b16 %v380, %v380
  %v397 = vpack.c.b16 %v381, %v381
  %v398 = vpack.c.b16 %v382, %v382
  %v399 = vpack.c.b16 %v383, %v383
  %v400 = vpack.c.b16 %v384, %v384
  %v401 = vpack.c.b16 %v385, %v385
  %v402 = vpack.c.b16 %v386, %v386
  %v403 = vpack.c.b16 %v387, %v387
  %v404 = vpack.c.b16 %v388, %v388
  %v405 = vpack.c.b16 %v389, %v389
  %v406 = vpack.c.b16 %v390, %v390
  %vm423 = vcmask 257024
  %424 = vst.msk [vmem:[%s3] sm:$0xf] %vm423, %v391
  %425 = vst.msk [vmem:[%s3 + $0x4] sm:$0xf] %vm423, %v392
  %426 = vst.msk [vmem:[%s3 + $0x8] sm:$0xf] %vm423, %v393
  %427 = vst.msk [vmem:[%s3 + $0xc] sm:$0xf] %vm423, %v394
  %428 = vst.msk [vmem:[%s3 + $0x10] sm:$0xf] %vm423, %v395
  %429 = vst.msk [vmem:[%s3 + $0x14] sm:$0xf] %vm423, %v396
  %430 = vst.msk [vmem:[%s3 + $0x18] sm:$0xf] %vm423, %v397
  %431 = vst.msk [vmem:[%s3 + $0x1c] sm:$0xf] %vm423, %v398
  %432 = vst.msk [vmem:[%s3 + $0x20] sm:$0xf] %vm423, %v399
  %433 = vst.msk [vmem:[%s3 + $0x24] sm:$0xf] %vm423, %v400
  %434 = vst.msk [vmem:[%s3 + $0x28] sm:$0xf] %vm423, %v401
  %435 = vst.msk [vmem:[%s3 + $0x2c] sm:$0xf] %vm423, %v402
  %436 = vst.msk [vmem:[%s3 + $0x30] sm:$0xf] %vm423, %v403
  %437 = vst.msk [vmem:[%s3 + $0x34] sm:$0xf] %vm423, %v404
  %438 = vst.msk [vmem:[%s3 + $0x38] sm:$0xf] %vm423, %v405
  %439 = vst.msk [vmem:[%s3 + $0x3c] sm:$0xf] %vm423, %v406
  // Predicated region
  $region14: #{net_forward.4} parent=0 // pred_check
    _
  $region15: #{net_forward.4} parent=0 // pred_check_branch
    %441 = sbr.rel (0) target = $region17
  $region16: #{net_forward.4} parent=0 // pred_region
    _
  $region17: #{net_forward.4} parent=0 // pred_fallthru
    _
  // Predicated region
  $region18: #{net_forward.4} parent=0 // pred_check
    _
  $region19: #{net_forward.4} parent=0 // pred_check_branch
    %443 = sbr.rel (0) target = $region21
  $region20: #{net_forward.4} parent=0 // pred_region
    _
  $region21: #{net_forward.4} parent=0 // pred_fallthru
    _

// kernel: net_forward.5
$region0: #{net_forward.5}
  #allocation0 [shape = 'u32[]', space=smem, size = 0x4, offset = 0x4, fixed_abs, tag = 'smem constant byte address 0x4 - core index']
  #allocation1 [shape = 'u32[144,128]{1,0:T(1,128)}', space=vmem, size = 0x12000, scoped, tag = 'internal scratch']
  %s0 = inlined_call_operand.vmem [shape: bf16[18,512], index: 0, kind: input, shape index: {}]
  %s1 = inlined_call_operand.vmem [shape: bf16[512,64], index: 1, kind: input, shape index: {}]
  %s2 = inlined_call_operand.vmem [shape: f32[1,64], index: 2, kind: input, shape index: {}]
  %s3 = inlined_call_operand.vmem [shape: bf16[18,64], index: 3, kind: output, shape index: {}]
  %s4 = sld [smem:[#allocation0]]
  $region22: #{net_forward.5} parent=0
    _
  %s6 = ssub.s32 1, %s4
  %s7 = scalar_select 0, %s6, %s4
  // Predicated region
  $region2: #{net_forward.5} parent=0 // pred_check
    _
  $region3: #{net_forward.5} parent=0 // pred_check_branch
    %9 = sbr.rel (0) target = $region5
  $region4: #{net_forward.5} parent=0 // pred_region
    _
  $region5: #{net_forward.5} parent=0 // pred_fallthru
    _
  // Predicated region
  $region6: #{net_forward.5} parent=0 // pred_check
    _
  $region7: #{net_forward.5} parent=0 // pred_check_branch
    %11 = sbr.rel (0) target = $region9
  $region8: #{net_forward.5} parent=0 // pred_region
    _
  $region9: #{net_forward.5} parent=0 // pred_fallthru
    _
  // Predicated region
  $region10: #{net_forward.5} parent=0 // pred_check
    _
  $region11: #{net_forward.5} parent=0 // pred_check_branch
    %13 = sbr.rel (0) target = $region13
  $region12: #{net_forward.5} parent=0 // pred_region
    _
  $region13: #{net_forward.5} parent=0 // pred_fallthru
    _
  %v15 = vld [vmem:[%s0] sm:$0xff]
  %v16 = vld [vmem:[%s0 + $0x8] sm:$0xff]
  %v17 = vld [vmem:[%s0 + $0x10] sm:$0xff]
  %v18 = vld [vmem:[%s0 + $0x18] sm:$0xff]
  %v19 = vld [vmem:[%s0 + $0x20] sm:$0x11]
  %v20 = vld [vmem:[%s0 + $0x28] sm:$0x11]
  %v21 = vld [vmem:[%s1] sm:$0xf]
  %v22 = vld [vmem:[%s1 + $0x4] sm:$0xf]
  %v23 = vld [vmem:[%s1 + $0x8] sm:$0xf]
  %v24 = vld [vmem:[%s1 + $0xc] sm:$0xf]
  %v25 = vld [vmem:[%s1 + $0x10] sm:$0xf]
  %v26 = vld [vmem:[%s1 + $0x14] sm:$0xf]
  %v27 = vld [vmem:[%s1 + $0x18] sm:$0xf]
  %v28 = vld [vmem:[%s1 + $0x1c] sm:$0xf]
  %v29 = vld [vmem:[%s1 + $0x20] sm:$0xf]
  %v30 = vld [vmem:[%s1 + $0x24] sm:$0xf]
  %v31 = vld [vmem:[%s1 + $0x28] sm:$0xf]
  %v32 = vld [vmem:[%s1 + $0x2c] sm:$0xf]
  %v33 = vld [vmem:[%s1 + $0x30] sm:$0xf]
  %v34 = vld [vmem:[%s1 + $0x34] sm:$0xf]
  %v35 = vld [vmem:[%s1 + $0x38] sm:$0xf]
  %v36 = vld [vmem:[%s1 + $0x3c] sm:$0xf]
  %v37 = vld [vmem:[%s1 + $0x40] sm:$0xf]
  %v38 = vld [vmem:[%s1 + $0x44] sm:$0xf]
  %v39 = vld [vmem:[%s1 + $0x48] sm:$0xf]
  %v40 = vld [vmem:[%s1 + $0x4c] sm:$0xf]
  %v41 = vld [vmem:[%s1 + $0x50] sm:$0xf]
  %v42 = vld [vmem:[%s1 + $0x54] sm:$0xf]
  %v43 = vld [vmem:[%s1 + $0x58] sm:$0xf]
  %v44 = vld [vmem:[%s1 + $0x5c] sm:$0xf]
  %v45 = vld [vmem:[%s1 + $0x60] sm:$0xf]
  %v46 = vld [vmem:[%s1 + $0x64] sm:$0xf]
  %v47 = vld [vmem:[%s1 + $0x68] sm:$0xf]
  %v48 = vld [vmem:[%s1 + $0x6c] sm:$0xf]
  %v49 = vld [vmem:[%s1 + $0x70] sm:$0xf]
  %v50 = vld [vmem:[%s1 + $0x74] sm:$0xf]
  %v51 = vld [vmem:[%s1 + $0x78] sm:$0xf]
  %v52 = vld [vmem:[%s1 + $0x7c] sm:$0xf]
  %v53 = vld [vmem:[%s1 + $0x80] sm:$0xf]
  %v54 = vld [vmem:[%s1 + $0x84] sm:$0xf]
  %v55 = vld [vmem:[%s1 + $0x88] sm:$0xf]
  %v56 = vld [vmem:[%s1 + $0x8c] sm:$0xf]
  %v57 = vld [vmem:[%s1 + $0x90] sm:$0xf]
  %v58 = vld [vmem:[%s1 + $0x94] sm:$0xf]
  %v59 = vld [vmem:[%s1 + $0x98] sm:$0xf]
  %v60 = vld [vmem:[%s1 + $0x9c] sm:$0xf]
  %v61 = vld [vmem:[%s1 + $0xa0] sm:$0xf]
  %v62 = vld [vmem:[%s1 + $0xa4] sm:$0xf]
  %v63 = vld [vmem:[%s1 + $0xa8] sm:$0xf]
  %v64 = vld [vmem:[%s1 + $0xac] sm:$0xf]
  %v65 = vld [vmem:[%s1 + $0xb0] sm:$0xf]
  %v66 = vld [vmem:[%s1 + $0xb4] sm:$0xf]
  %v67 = vld [vmem:[%s1 + $0xb8] sm:$0xf]
  %v68 = vld [vmem:[%s1 + $0xbc] sm:$0xf]
  %v69 = vld [vmem:[%s1 + $0xc0] sm:$0xf]
  %v70 = vld [vmem:[%s1 + $0xc4] sm:$0xf]
  %v71 = vld [vmem:[%s1 + $0xc8] sm:$0xf]
  %v72 = vld [vmem:[%s1 + $0xcc] sm:$0xf]
  %v73 = vld [vmem:[%s1 + $0xd0] sm:$0xf]
  %v74 = vld [vmem:[%s1 + $0xd4] sm:$0xf]
  %v75 = vld [vmem:[%s1 + $0xd8] sm:$0xf]
  %v76 = vld [vmem:[%s1 + $0xdc] sm:$0xf]
  %v77 = vld [vmem:[%s1 + $0xe0] sm:$0xf]
  %v78 = vld [vmem:[%s1 + $0xe4] sm:$0xf]
  %v79 = vld [vmem:[%s1 + $0xe8] sm:$0xf]
  %v80 = vld [vmem:[%s1 + $0xec] sm:$0xf]
  %v81 = vld [vmem:[%s1 + $0xf0] sm:$0xf]
  %v82 = vld [vmem:[%s1 + $0xf4] sm:$0xf]
  %v83 = vld [vmem:[%s1 + $0xf8] sm:$0xf]
  %v84 = vld [vmem:[%s1 + $0xfc] sm:$0xf]
  %v85 = vld [vmem:[%s2] sm:$0x1]
  %v87 = vlaneseq
  %v88 = vshrl.u32 %v87, 7
  %v89 = vsub.s32 0, %v88
  %v90 = vrot.slane %v85, %v89
  %v98 = vunpack.c.l.b16 %v15
  %v99 = vunpack.c.h.b16 %v15
  %v100 = vunpack.c.l.b16 %v16
  %v101 = vunpack.c.h.b16 %v16
  %v102 = vunpack.c.l.b16 %v17
  %v103 = vunpack.c.h.b16 %v17
  %v104 = vunpack.c.l.b16 %v18
  %v105 = vunpack.c.h.b16 %v18
  %v106 = vunpack.c.l.b16 %v19
  %v107 = vunpack.c.h.b16 %v19
  %v108 = vunpack.c.l.b16 %v20
  %v109 = vunpack.c.h.b16 %v20
  %v110 = vpack.c.b16 %v102, %v98
  %v111 = vpack.c.b16 %v103, %v99
  %v112 = vpack.c.b16 %v104, %v100
  %v113 = vpack.c.b16 %v105, %v101
  %v114 = vpack.c.b16 %v106, %v106
  %v115 = vpack.c.b16 %v107, %v107
  %v116 = vpack.c.b16 %v108, %v108
  %v117 = vpack.c.b16 %v109, %v109
  %v190 = vunpack.c.l.b16 %v21
  %v191 = vunpack.c.l.b16 %v22
  %v192 = vunpack.c.l.b16 %v23
  %v193 = vunpack.c.l.b16 %v24
  %v194 = vunpack.c.l.b16 %v25
  %v195 = vunpack.c.l.b16 %v26
  %v196 = vunpack.c.l.b16 %v27
  %v197 = vunpack.c.l.b16 %v28
  %v198 = vunpack.c.l.b16 %v29
  %v199 = vunpack.c.l.b16 %v30
  %v200 = vunpack.c.l.b16 %v31
  %v201 = vunpack.c.l.b16 %v32
  %v202 = vunpack.c.l.b16 %v33
  %v203 = vunpack.c.l.b16 %v34
  %v204 = vunpack.c.l.b16 %v35
  %v205 = vunpack.c.l.b16 %v36
  %v206 = vunpack.c.l.b16 %v37
  %v207 = vunpack.c.l.b16 %v38
  %v208 = vunpack.c.l.b16 %v39
  %v209 = vunpack.c.l.b16 %v40
  %v210 = vunpack.c.l.b16 %v41
  %v211 = vunpack.c.l.b16 %v42
  %v212 = vunpack.c.l.b16 %v43
  %v213 = vunpack.c.l.b16 %v44
  %v214 = vunpack.c.l.b16 %v45
  %v215 = vunpack.c.l.b16 %v46
  %v216 = vunpack.c.l.b16 %v47
  %v217 = vunpack.c.l.b16 %v48
  %v218 = vunpack.c.l.b16 %v49
  %v219 = vunpack.c.l.b16 %v50
  %v220 = vunpack.c.l.b16 %v51
  %v221 = vunpack.c.l.b16 %v52
  %v222 = vunpack.c.l.b16 %v53
  %v223 = vunpack.c.l.b16 %v54
  %v224 = vunpack.c.l.b16 %v55
  %v225 = vunpack.c.l.b16 %v56
  %v226 = vunpack.c.l.b16 %v57
  %v227 = vunpack.c.l.b16 %v58
  %v228 = vunpack.c.l.b16 %v59
  %v229 = vunpack.c.l.b16 %v60
  %v230 = vunpack.c.l.b16 %v61
  %v231 = vunpack.c.l.b16 %v62
  %v232 = vunpack.c.l.b16 %v63
  %v233 = vunpack.c.l.b16 %v64
  %v234 = vunpack.c.l.b16 %v65
  %v235 = vunpack.c.l.b16 %v66
  %v236 = vunpack.c.l.b16 %v67
  %v237 = vunpack.c.l.b16 %v68
  %v238 = vunpack.c.l.b16 %v69
  %v239 = vunpack.c.l.b16 %v70
  %v240 = vunpack.c.l.b16 %v71
  %v241 = vunpack.c.l.b16 %v72
  %v242 = vunpack.c.l.b16 %v73
  %v243 = vunpack.c.l.b16 %v74
  %v244 = vunpack.c.l.b16 %v75
  %v245 = vunpack.c.l.b16 %v76
  %v246 = vunpack.c.l.b16 %v77
  %v247 = vunpack.c.l.b16 %v78
  %v248 = vunpack.c.l.b16 %v79
  %v249 = vunpack.c.l.b16 %v80
  %v250 = vunpack.c.l.b16 %v81
  %v251 = vunpack.c.l.b16 %v82
  %v252 = vunpack.c.l.b16 %v83
  %v253 = vunpack.c.l.b16 %v84
  %v254 = vpack.c.b16 %v191, %v190
  %v255 = vpack.c.b16 %v193, %v192
  %v256 = vpack.c.b16 %v195, %v194
  %v257 = vpack.c.b16 %v197, %v196
  %v258 = vpack.c.b16 %v199, %v198
  %v259 = vpack.c.b16 %v201, %v200
  %v260 = vpack.c.b16 %v203, %v202
  %v261 = vpack.c.b16 %v205, %v204
  %v262 = vpack.c.b16 %v207, %v206
  %v263 = vpack.c.b16 %v209, %v208
  %v264 = vpack.c.b16 %v211, %v210
  %v265 = vpack.c.b16 %v213, %v212
  %v266 = vpack.c.b16 %v215, %v214
  %v267 = vpack.c.b16 %v217, %v216
  %v268 = vpack.c.b16 %v219, %v218
  %v269 = vpack.c.b16 %v221, %v220
  %v270 = vpack.c.b16 %v223, %v222
  %v271 = vpack.c.b16 %v225, %v224
  %v272 = vpack.c.b16 %v227, %v226
  %v273 = vpack.c.b16 %v229, %v228
  %v274 = vpack.c.b16 %v231, %v230
  %v275 = vpack.c.b16 %v233, %v232
  %v276 = vpack.c.b16 %v235, %v234
  %v277 = vpack.c.b16 %v237, %v236
  %v278 = vpack.c.b16 %v239, %v238
  %v279 = vpack.c.b16 %v241, %v240
  %v280 = vpack.c.b16 %v243, %v242
  %v281 = vpack.c.b16 %v245, %v244
  %v282 = vpack.c.b16 %v247, %v246
  %v283 = vpack.c.b16 %v249, %v248
  %v284 = vpack.c.b16 %v251, %v250
  %v285 = vpack.c.b16 %v253, %v252
  %318 = vmatprep.subr.bf16.mxu0 0
  %319 = vmatpush1.bf16.msra.mxu0 %v254
  %320 = vmatprep.subr.bf16.mxu0 0
  %321 = vmatpush1.bf16.msra.mxu0 %v255
  %322 = vmatprep.subr.bf16.mxu0 0
  %323 = vmatpush1.bf16.msra.mxu0 %v256
  %324 = vmatprep.subr.bf16.mxu0 0
  %325 = vmatpush1.bf16.msra.mxu0 %v257
  %326 = vmatprep.subr.bf16.mxu0 0
  %327 = vmatpush1.bf16.msra.mxu0 %v258
  %328 = vmatprep.subr.bf16.mxu0 0
  %329 = vmatpush1.bf16.msra.mxu0 %v259
  %330 = vmatprep.subr.bf16.mxu0 0
  %331 = vmatpush1.bf16.msra.mxu0 %v260
  %332 = vmatprep.subr.bf16.mxu0 0
  %333 = vmatpush1.bf16.msra.mxu0 %v261
  %334 = vmatprep.subr.bf16.mxu0 0
  %335 = vmatpush1.bf16.msra.mxu0 %v262
  %336 = vmatprep.subr.bf16.mxu0 0
  %337 = vmatpush1.bf16.msra.mxu0 %v263
  %338 = vmatprep.subr.bf16.mxu0 0
  %339 = vmatpush1.bf16.msra.mxu0 %v264
  %340 = vmatprep.subr.bf16.mxu0 0
  %341 = vmatpush1.bf16.msra.mxu0 %v265
  %342 = vmatprep.subr.bf16.mxu0 0
  %343 = vmatpush1.bf16.msra.mxu0 %v266
  %344 = vmatprep.subr.bf16.mxu0 0
  %345 = vmatpush1.bf16.msra.mxu0 %v267
  %346 = vmatprep.subr.bf16.mxu0 0
  %347 = vmatpush1.bf16.msra.mxu0 %v268
  %348 = vmatprep.subr.bf16.mxu0 0
  %349 = vmatpush1.bf16.msra.mxu0 %v269
  %350 = vmatprep.mubr.bf16.mxu0 %v111
  %351 = vmatmul.mubr.bf16.gmra.mrb[0].mxu0 %v110
  %v352 = vpop.f32.mrb[0].mxu0
  %v353 = vadd.f32 %v90, %v352
  %v354 = vpop.f32.mrb[0].mxu0
  %v355 = vpop.f32.mrb[0].mxu0
  %v356 = vadd.f32 %v90, %v355
  %v357 = vpop.f32.mrb[0].mxu0
  %358 = vmatprep.mubr.bf16.mxu0 %v115
  %359 = vmatmul.mubr.bf16.gmra.mrb[0].mxu0 %v114
  %v360 = vpop.f32.mrb[0].mxu0
  %v361 = vadd.f32 %v90, %v360
  %v362 = vpop.f32.mrb[0].mxu0
  %v363 = vpop.f32.mrb[0].mxu0
  %v364 = vpop.f32.mrb[0].mxu0
  %365 = vdwg.mxu0
  %366 = vmatprep.subr.bf16.mxu0 0
  %367 = vmatpush1.bf16.msra.mxu0 %v270
  %368 = vmatprep.subr.bf16.mxu0 0
  %369 = vmatpush1.bf16.msra.mxu0 %v271
  %370 = vmatprep.subr.bf16.mxu0 0
  %371 = vmatpush1.bf16.msra.mxu0 %v272
  %372 = vmatprep.subr.bf16.mxu0 0
  %373 = vmatpush1.bf16.msra.mxu0 %v273
  %374 = vmatprep.subr.bf16.mxu0 0
  %375 = vmatpush1.bf16.msra.mxu0 %v274
  %376 = vmatprep.subr.bf16.mxu0 0
  %377 = vmatpush1.bf16.msra.mxu0 %v275
  %378 = vmatprep.subr.bf16.mxu0 0
  %379 = vmatpush1.bf16.msra.mxu0 %v276
  %380 = vmatprep.subr.bf16.mxu0 0
  %381 = vmatpush1.bf16.msra.mxu0 %v277
  %382 = vmatprep.subr.bf16.mxu0 0
  %383 = vmatpush1.bf16.msra.mxu0 %v278
  %384 = vmatprep.subr.bf16.mxu0 0
  %385 = vmatpush1.bf16.msra.mxu0 %v279
  %386 = vmatprep.subr.bf16.mxu0 0
  %387 = vmatpush1.bf16.msra.mxu0 %v280
  %388 = vmatprep.subr.bf16.mxu0 0
  %389 = vmatpush1.bf16.msra.mxu0 %v281
  %390 = vmatprep.subr.bf16.mxu0 0
  %391 = vmatpush1.bf16.msra.mxu0 %v282
  %392 = vmatprep.subr.bf16.mxu0 0
  %393 = vmatpush1.bf16.msra.mxu0 %v283
  %394 = vmatprep.subr.bf16.mxu0 0
  %395 = vmatpush1.bf16.msra.mxu0 %v284
  %396 = vmatprep.subr.bf16.mxu0 0
  %397 = vmatpush1.bf16.msra.mxu0 %v285
  %398 = vmatprep.mubr.bf16.mxu0 %v113
  %399 = vmatmul.mubr.bf16.gmra.mrb[0].mxu0 %v112
  %v400 = vpop.f32.mrb[0].mxu0
  %v401 = vadd.f32 %v353, %v400
  %v402 = vpop.f32.mrb[0].mxu0
  %v403 = vpop.f32.mrb[0].mxu0
  %v404 = vadd.f32 %v356, %v403
  %v405 = vpop.f32.mrb[0].mxu0
  %406 = vmatprep.mubr.bf16.mxu0 %v117
  %407 = vmatmul.mubr.bf16.gmra.mrb[0].mxu0 %v116
  %v408 = vpop.f32.mrb[0].mxu0
  %v409 = vadd.f32 %v361, %v408
  %v410 = vpop.f32.mrb[0].mxu0
  %v411 = vpop.f32.mrb[0].mxu0
  %v412 = vpop.f32.mrb[0].mxu0
  %413 = vdwg.mxu0
  %v414 = vmax.f32 %v401, 0.0
  %v415 = vmax.f32 %v404, 0.0
  %v416 = vmax.f32 %v409, 0.0
  %v417 = vpack.c.bf16 %v415, %v414
  %v418 = vpack.c.bf16 %v416, %v416
  %v421 = vunpack.c.l.b16 %v417
  %v422 = vunpack.c.h.b16 %v417
  %v423 = vunpack.c.l.b16 %v418
  %v424 = vpack.c.b16 %v421, %v421
  %v425 = vpack.c.b16 %v422, %v422
  %v426 = vpack.c.b16 %v423, %v423
  %vm430 = vcmask 519168
  %431 = vst.msk [vmem:[%s3] sm:$0xf] %vm430, %v424
  %432 = vst.msk [vmem:[%s3 + $0x4] sm:$0xf] %vm430, %v425
  %vm433 = vcmask 516096
  %434 = vst.msk [vmem:[%s3 + $0x8] sm:$0x1] %vm433, %v426
  // Predicated region
  $region14: #{net_forward.5} parent=0 // pred_check
    _
  $region15: #{net_forward.5} parent=0 // pred_check_branch
    %436 = sbr.rel (0) target = $region17
  $region16: #{net_forward.5} parent=0 // pred_region
    _
  $region17: #{net_forward.5} parent=0 // pred_fallthru
    _
  // Predicated region
  $region18: #{net_forward.5} parent=0 // pred_check
    _
  $region19: #{net_forward.5} parent=0 // pred_check_branch
    %438 = sbr.rel (0) target = $region21
  $region20: #{net_forward.5} parent=0 // pred_region
    _
  $region21: #{net_forward.5} parent=0 // pred_fallthru
    _

// kernel: net_forward.6
$region0: #{net_forward.6}
  #allocation0 [shape = 'u32[]', space=smem, size = 0x4, offset = 0x4, fixed_abs, tag = 'smem constant byte address 0x4 - core index']
  #allocation1 [shape = 'u32[144,128]{1,0:T(1,128)}', space=vmem, size = 0x12000, scoped, tag = 'internal scratch']
  %s0 = inlined_call_operand.vmem [shape: bf16[2,576], index: 0, kind: input, shape index: {}]
  %s1 = inlined_call_operand.vmem [shape: bf16[576,64], index: 1, kind: input, shape index: {}]
  %s2 = inlined_call_operand.vmem [shape: f32[1,64], index: 2, kind: input, shape index: {}]
  %s3 = inlined_call_operand.vmem [shape: bf16[2,64], index: 3, kind: output, shape index: {}]
  %s4 = sld [smem:[#allocation0]]
  $region22: #{net_forward.6} parent=0
    _
  %s6 = ssub.s32 1, %s4
  %s7 = scalar_select 0, %s6, %s4
  // Predicated region
  $region2: #{net_forward.6} parent=0 // pred_check
    _
  $region3: #{net_forward.6} parent=0 // pred_check_branch
    %9 = sbr.rel (0) target = $region5
  $region4: #{net_forward.6} parent=0 // pred_region
    _
  $region5: #{net_forward.6} parent=0 // pred_fallthru
    _
  // Predicated region
  $region6: #{net_forward.6} parent=0 // pred_check
    _
  $region7: #{net_forward.6} parent=0 // pred_check_branch
    %11 = sbr.rel (0) target = $region9
  $region8: #{net_forward.6} parent=0 // pred_region
    _
  $region9: #{net_forward.6} parent=0 // pred_fallthru
    _
  // Predicated region
  $region10: #{net_forward.6} parent=0 // pred_check
    _
  $region11: #{net_forward.6} parent=0 // pred_check_branch
    %13 = sbr.rel (0) target = $region13
  $region12: #{net_forward.6} parent=0 // pred_region
    _
  $region13: #{net_forward.6} parent=0 // pred_fallthru
    _
  %v15 = vld [vmem:[%s0] sm:$0x1f]
  %v16 = vld [vmem:[%s1] sm:$0xf]
  %v17 = vld [vmem:[%s1 + $0x4] sm:$0xf]
  %v18 = vld [vmem:[%s1 + $0x8] sm:$0xf]
  %v19 = vld [vmem:[%s1 + $0xc] sm:$0xf]
  %v20 = vld [vmem:[%s1 + $0x10] sm:$0xf]
  %v21 = vld [vmem:[%s1 + $0x14] sm:$0xf]
  %v22 = vld [vmem:[%s1 + $0x18] sm:$0xf]
  %v23 = vld [vmem:[%s1 + $0x1c] sm:$0xf]
  %v24 = vld [vmem:[%s1 + $0x20] sm:$0xf]
  %v25 = vld [vmem:[%s1 + $0x24] sm:$0xf]
  %v26 = vld [vmem:[%s1 + $0x28] sm:$0xf]
  %v27 = vld [vmem:[%s1 + $0x2c] sm:$0xf]
  %v28 = vld [vmem:[%s1 + $0x30] sm:$0xf]
  %v29 = vld [vmem:[%s1 + $0x34] sm:$0xf]
  %v30 = vld [vmem:[%s1 + $0x38] sm:$0xf]
  %v31 = vld [vmem:[%s1 + $0x3c] sm:$0xf]
  %v32 = vld [vmem:[%s1 + $0x40] sm:$0xf]
  %v33 = vld [vmem:[%s1 + $0x44] sm:$0xf]
  %v34 = vld [vmem:[%s1 + $0x48] sm:$0xf]
  %v35 = vld [vmem:[%s1 + $0x4c] sm:$0xf]
  %v36 = vld [vmem:[%s1 + $0x50] sm:$0xf]
  %v37 = vld [vmem:[%s1 + $0x54] sm:$0xf]
  %v38 = vld [vmem:[%s1 + $0x58] sm:$0xf]
  %v39 = vld [vmem:[%s1 + $0x5c] sm:$0xf]
  %v40 = vld [vmem:[%s1 + $0x60] sm:$0xf]
  %v41 = vld [vmem:[%s1 + $0x64] sm:$0xf]
  %v42 = vld [vmem:[%s1 + $0x68] sm:$0xf]
  %v43 = vld [vmem:[%s1 + $0x6c] sm:$0xf]
  %v44 = vld [vmem:[%s1 + $0x70] sm:$0xf]
  %v45 = vld [vmem:[%s1 + $0x74] sm:$0xf]
  %v46 = vld [vmem:[%s1 + $0x78] sm:$0xf]
  %v47 = vld [vmem:[%s1 + $0x7c] sm:$0xf]
  %v48 = vld [vmem:[%s1 + $0x80] sm:$0xf]
  %v49 = vld [vmem:[%s1 + $0x84] sm:$0xf]
  %v50 = vld [vmem:[%s1 + $0x88] sm:$0xf]
  %v51 = vld [vmem:[%s1 + $0x8c] sm:$0xf]
  %v52 = vld [vmem:[%s1 + $0x90] sm:$0xf]
  %v53 = vld [vmem:[%s1 + $0x94] sm:$0xf]
  %v54 = vld [vmem:[%s1 + $0x98] sm:$0xf]
  %v55 = vld [vmem:[%s1 + $0x9c] sm:$0xf]
  %v56 = vld [vmem:[%s1 + $0xa0] sm:$0xf]
  %v57 = vld [vmem:[%s1 + $0xa4] sm:$0xf]
  %v58 = vld [vmem:[%s1 + $0xa8] sm:$0xf]
  %v59 = vld [vmem:[%s1 + $0xac] sm:$0xf]
  %v60 = vld [vmem:[%s1 + $0xb0] sm:$0xf]
  %v61 = vld [vmem:[%s1 + $0xb4] sm:$0xf]
  %v62 = vld [vmem:[%s1 + $0xb8] sm:$0xf]
  %v63 = vld [vmem:[%s1 + $0xbc] sm:$0xf]
  %v64 = vld [vmem:[%s1 + $0xc0] sm:$0xf]
  %v65 = vld [vmem:[%s1 + $0xc4] sm:$0xf]
  %v66 = vld [vmem:[%s1 + $0xc8] sm:$0xf]
  %v67 = vld [vmem:[%s1 + $0xcc] sm:$0xf]
  %v68 = vld [vmem:[%s1 + $0xd0] sm:$0xf]
  %v69 = vld [vmem:[%s1 + $0xd4] sm:$0xf]
  %v70 = vld [vmem:[%s1 + $0xd8] sm:$0xf]
  %v71 = vld [vmem:[%s1 + $0xdc] sm:$0xf]
  %v72 = vld [vmem:[%s1 + $0xe0] sm:$0xf]
  %v73 = vld [vmem:[%s1 + $0xe4] sm:$0xf]
  %v74 = vld [vmem:[%s1 + $0xe8] sm:$0xf]
  %v75 = vld [vmem:[%s1 + $0xec] sm:$0xf]
  %v76 = vld [vmem:[%s1 + $0xf0] sm:$0xf]
  %v77 = vld [vmem:[%s1 + $0xf4] sm:$0xf]
  %v78 = vld [vmem:[%s1 + $0xf8] sm:$0xf]
  %v79 = vld [vmem:[%s1 + $0xfc] sm:$0xf]
  %v80 = vld [vmem:[%s1 + $0x100] sm:$0xf]
  %v81 = vld [vmem:[%s1 + $0x104] sm:$0xf]
  %v82 = vld [vmem:[%s1 + $0x108] sm:$0xf]
  %v83 = vld [vmem:[%s1 + $0x10c] sm:$0xf]
  %v84 = vld [vmem:[%s1 + $0x110] sm:$0xf]
  %v85 = vld [vmem:[%s1 + $0x114] sm:$0xf]
  %v86 = vld [vmem:[%s1 + $0x118] sm:$0xf]
  %v87 = vld [vmem:[%s1 + $0x11c] sm:$0xf]
  %v88 = vld [vmem:[%s2] sm:$0x1]
  %v90 = vlaneseq
  %v91 = vshrl.u32 %v90, 7
  %v92 = vsub.s32 0, %v91
  %v93 = vrot.slane %v88, %v92
  %v96 = vcombine.high %v15, %v15
  %v98 = vunpack.c.l.s4 1966171168
  %v99 = vunpack.c.0.s8 %v98
  %v100 = vlaneseq
  %v101 = vshrl.u32 %v100, 7
  %v102 = vsub.s32 %v99, %v101
  %v103 = vrot.slane %v15, %v102
  %v105 = vunpack.c.l.s4 1966171168
  %v106 = vunpack.c.0.s8 %v105
  %v107 = vlaneseq
  %v108 = vshrl.u32 %v107, 7
  %v109 = vsub.s32 %v106, %v108
  %v110 = vrot.slane %v96, %v109
  %v111 = vcombine.high %v103, %v103
  %v113 = vunpack.c.l.s4 1966171168
  %v114 = vunpack.c.0.s8 %v113
  %v115 = vlaneseq
  %v116 = vshrl.u32 %v115, 7
  %v117 = vsub.s32 %v114, %v116
  %v118 = vrot.slane %v103, %v117
  %v120 = vunpack.c.l.s4 1966171168
  %v121 = vunpack.c.0.s8 %v120
  %v122 = vlaneseq
  %v123 = vshrl.u32 %v122, 7
  %v124 = vsub.s32 %v121, %v123
  %v125 = vrot.slane %v110, %v124
  %v127 = vunpack.c.l.s4 1966171168
  %v128 = vunpack.c.0.s8 %v127
  %v129 = vlaneseq
  %v130 = vshrl.u32 %v129, 7
  %v131 = vsub.s32 %v128, %v130
  %v132 = vrot.slane %v111, %v131
  %v133 = vcombine.high %v118, %v118
  %v134 = vcombine.high %v132, %v132
  %v211 = vunpack.c.l.b16 %v16
  %v212 = vunpack.c.l.b16 %v17
  %v213 = vunpack.c.l.b16 %v18
  %v214 = vunpack.c.l.b16 %v19
  %v215 = vunpack.c.l.b16 %v20
  %v216 = vunpack.c.l.b16 %v21
  %v217 = vunpack.c.l.b16 %v22
  %v218 = vunpack.c.l.b16 %v23
  %v219 = vunpack.c.l.b16 %v24
  %v220 = vunpack.c.l.b16 %v25
  %v221 = vunpack.c.l.b16 %v26
  %v222 = vunpack.c.l.b16 %v27
  %v223 = vunpack.c.l.b16 %v28
  %v224 = vunpack.c.l.b16 %v29
  %v225 = vunpack.c.l.b16 %v30
  %v226 = vunpack.c.l.b16 %v31
  %v227 = vunpack.c.l.b16 %v32
  %v228 = vunpack.c.l.b16 %v33
  %v229 = vunpack.c.l.b16 %v34
  %v230 = vunpack.c.l.b16 %v35
  %v231 = vunpack.c.l.b16 %v36
  %v232 = vunpack.c.l.b16 %v37
  %v233 = vunpack.c.l.b16 %v38
  %v234 = vunpack.c.l.b16 %v39
  %v235 = vunpack.c.l.b16 %v40
  %v236 = vunpack.c.l.b16 %v41
  %v237 = vunpack.c.l.b16 %v42
  %v238 = vunpack.c.l.b16 %v43
  %v239 = vunpack.c.l.b16 %v44
  %v240 = vunpack.c.l.b16 %v45
  %v241 = vunpack.c.l.b16 %v46
  %v242 = vunpack.c.l.b16 %v47
  %v243 = vunpack.c.l.b16 %v48
  %v244 = vunpack.c.l.b16 %v49
  %v245 = vunpack.c.l.b16 %v50
  %v246 = vunpack.c.l.b16 %v51
  %v247 = vunpack.c.l.b16 %v52
  %v248 = vunpack.c.l.b16 %v53
  %v249 = vunpack.c.l.b16 %v54
  %v250 = vunpack.c.l.b16 %v55
  %v251 = vunpack.c.l.b16 %v56
  %v252 = vunpack.c.l.b16 %v57
  %v253 = vunpack.c.l.b16 %v58
  %v254 = vunpack.c.l.b16 %v59
  %v255 = vunpack.c.l.b16 %v60
  %v256 = vunpack.c.l.b16 %v61
  %v257 = vunpack.c.l.b16 %v62
  %v258 = vunpack.c.l.b16 %v63
  %v259 = vunpack.c.l.b16 %v64
  %v260 = vunpack.c.l.b16 %v65
  %v261 = vunpack.c.l.b16 %v66
  %v262 = vunpack.c.l.b16 %v67
  %v263 = vunpack.c.l.b16 %v68
  %v264 = vunpack.c.l.b16 %v69
  %v265 = vunpack.c.l.b16 %v70
  %v266 = vunpack.c.l.b16 %v71
  %v267 = vunpack.c.l.b16 %v72
  %v268 = vunpack.c.l.b16 %v73
  %v269 = vunpack.c.l.b16 %v74
  %v270 = vunpack.c.l.b16 %v75
  %v271 = vunpack.c.l.b16 %v76
  %v272 = vunpack.c.l.b16 %v77
  %v273 = vunpack.c.l.b16 %v78
  %v274 = vunpack.c.l.b16 %v79
  %v275 = vunpack.c.l.b16 %v80
  %v276 = vunpack.c.l.b16 %v81
  %v277 = vunpack.c.l.b16 %v82
  %v278 = vunpack.c.l.b16 %v83
  %v279 = vunpack.c.l.b16 %v84
  %v280 = vunpack.c.l.b16 %v85
  %v281 = vunpack.c.l.b16 %v86
  %v282 = vunpack.c.l.b16 %v87
  %v283 = vpack.c.b16 %v212, %v211
  %v284 = vpack.c.b16 %v214, %v213
  %v285 = vpack.c.b16 %v216, %v215
  %v286 = vpack.c.b16 %v218, %v217
  %v287 = vpack.c.b16 %v220, %v219
  %v288 = vpack.c.b16 %v222, %v221
  %v289 = vpack.c.b16 %v224, %v223
  %v290 = vpack.c.b16 %v226, %v225
  %v291 = vpack.c.b16 %v228, %v227
  %v292 = vpack.c.b16 %v230, %v229
  %v293 = vpack.c.b16 %v232, %v231
  %v294 = vpack.c.b16 %v234, %v233
  %v295 = vpack.c.b16 %v236, %v235
  %v296 = vpack.c.b16 %v238, %v237
  %v297 = vpack.c.b16 %v240, %v239
  %v298 = vpack.c.b16 %v242, %v241
  %v299 = vpack.c.b16 %v244, %v243
  %v300 = vpack.c.b16 %v246, %v245
  %v301 = vpack.c.b16 %v248, %v247
  %v302 = vpack.c.b16 %v250, %v249
  %v303 = vpack.c.b16 %v252, %v251
  %v304 = vpack.c.b16 %v254, %v253
  %v305 = vpack.c.b16 %v256, %v255
  %v306 = vpack.c.b16 %v258, %v257
  %v307 = vpack.c.b16 %v260, %v259
  %v308 = vpack.c.b16 %v262, %v261
  %v309 = vpack.c.b16 %v264, %v263
  %v310 = vpack.c.b16 %v266, %v265
  %v311 = vpack.c.b16 %v268, %v267
  %v312 = vpack.c.b16 %v270, %v269
  %v313 = vpack.c.b16 %v272, %v271
  %v314 = vpack.c.b16 %v274, %v273
  %v315 = vpack.c.b16 %v276, %v275
  %v316 = vpack.c.b16 %v278, %v277
  %v317 = vpack.c.b16 %v280, %v279
  %v318 = vpack.c.b16 %v282, %v281
  %vm355 = vcmask 523264
  %v357 = vsel %vm355, %v125, 0
  %359 = vmatprep.subr.bf16.mxu0 0
  %360 = vmatpush1.bf16.msra.mxu0 %v283
  %361 = vmatprep.subr.bf16.mxu0 0
  %362 = vmatpush1.bf16.msra.mxu0 %v284
  %363 = vmatprep.subr.bf16.mxu0 0
  %364 = vmatpush1.bf16.msra.mxu0 %v285
  %365 = vmatprep.subr.bf16.mxu0 0
  %366 = vmatpush1.bf16.msra.mxu0 %v286
  %367 = vmatprep.subr.bf16.mxu0 0
  %368 = vmatpush1.bf16.msra.mxu0 %v287
  %369 = vmatprep.subr.bf16.mxu0 0
  %370 = vmatpush1.bf16.msra.mxu0 %v288
  %371 = vmatprep.subr.bf16.mxu0 0
  %372 = vmatpush1.bf16.msra.mxu0 %v289
  %373 = vmatprep.subr.bf16.mxu0 0
  %374 = vmatpush1.bf16.msra.mxu0 %v290
  %375 = vmatprep.subr.bf16.mxu0 0
  %376 = vmatpush1.bf16.msra.mxu0 %v291
  %377 = vmatprep.subr.bf16.mxu0 0
  %378 = vmatpush1.bf16.msra.mxu0 %v292
  %379 = vmatprep.subr.bf16.mxu0 0
  %380 = vmatpush1.bf16.msra.mxu0 %v293
  %381 = vmatprep.subr.bf16.mxu0 0
  %382 = vmatpush1.bf16.msra.mxu0 %v294
  %383 = vmatprep.subr.bf16.mxu0 0
  %384 = vmatpush1.bf16.msra.mxu0 %v295
  %385 = vmatprep.subr.bf16.mxu0 0
  %386 = vmatpush1.bf16.msra.mxu0 %v296
  %387 = vmatprep.subr.bf16.mxu0 0
  %388 = vmatpush1.bf16.msra.mxu0 %v297
  %389 = vmatprep.subr.bf16.mxu0 0
  %390 = vmatpush1.bf16.msra.mxu0 %v298
  %391 = vmatprep.mubr.bf16.mxu0 %v132
  %392 = vmatmul.mubr.bf16.gmra.mrb[0].mxu0 %v118
  %v393 = vpop.f32.mrb[0].mxu0
  %v394 = vadd.f32 %v93, %v393
  %v395 = vpop.f32.mrb[0].mxu0
  %v396 = vpop.f32.mrb[0].mxu0
  %v397 = vpop.f32.mrb[0].mxu0
  %398 = vdwg.mxu0
  %399 = vmatprep.subr.bf16.mxu0 0
  %400 = vmatpush1.bf16.msra.mxu0 %v299
  %401 = vmatprep.subr.bf16.mxu0 0
  %402 = vmatpush1.bf16.msra.mxu0 %v300
  %403 = vmatprep.subr.bf16.mxu0 0
  %404 = vmatpush1.bf16.msra.mxu0 %v301
  %405 = vmatprep.subr.bf16.mxu0 0
  %406 = vmatpush1.bf16.msra.mxu0 %v302
  %407 = vmatprep.subr.bf16.mxu0 0
  %408 = vmatpush1.bf16.msra.mxu0 %v303
  %409 = vmatprep.subr.bf16.mxu0 0
  %410 = vmatpush1.bf16.msra.mxu0 %v304
  %411 = vmatprep.subr.bf16.mxu0 0
  %412 = vmatpush1.bf16.msra.mxu0 %v305
  %413 = vmatprep.subr.bf16.mxu0 0
  %414 = vmatpush1.bf16.msra.mxu0 %v306
  %415 = vmatprep.subr.bf16.mxu0 0
  %416 = vmatpush1.bf16.msra.mxu0 %v307
  %417 = vmatprep.subr.bf16.mxu0 0
  %418 = vmatpush1.bf16.msra.mxu0 %v308
  %419 = vmatprep.subr.bf16.mxu0 0
  %420 = vmatpush1.bf16.msra.mxu0 %v309
  %421 = vmatprep.subr.bf16.mxu0 0
  %422 = vmatpush1.bf16.msra.mxu0 %v310
  %423 = vmatprep.subr.bf16.mxu0 0
  %424 = vmatpush1.bf16.msra.mxu0 %v311
  %425 = vmatprep.subr.bf16.mxu0 0
  %426 = vmatpush1.bf16.msra.mxu0 %v312
  %427 = vmatprep.subr.bf16.mxu0 0
  %428 = vmatpush1.bf16.msra.mxu0 %v313
  %429 = vmatprep.subr.bf16.mxu0 0
  %430 = vmatpush1.bf16.msra.mxu0 %v314
  %431 = vmatprep.mubr.bf16.mxu0 %v134
  %432 = vmatmul.mubr.bf16.gmra.mrb[0].mxu0 %v133
  %v433 = vpop.f32.mrb[0].mxu0
  %v434 = vadd.f32 %v394, %v433
  %v435 = vpop.f32.mrb[0].mxu0
  %v436 = vpop.f32.mrb[0].mxu0
  %v437 = vpop.f32.mrb[0].mxu0
  %438 = vdwg.mxu0
  %439 = vmatprep.subr.bf16.mxu0 0
  %440 = vmatpush1.bf16.msra.mxu0 %v315
  %441 = vmatprep.subr.bf16.mxu0 0
  %442 = vmatpush1.bf16.msra.mxu0 %v316
  %443 = vmatprep.subr.bf16.mxu0 0
  %444 = vmatpush1.bf16.msra.mxu0 %v317
  %445 = vmatprep.subr.bf16.mxu0 0
  %446 = vmatpush1.bf16.msra.mxu0 %v318
  %447 = vmatprep.subr.bf16.mxu0 0
  %448 = vmatpush1.bf16.msra.mxu0 0
  %449 = vmatprep.subr.bf16.mxu0 0
  %450 = vmatpush1.bf16.msra.mxu0 0
  %451 = vmatprep.subr.bf16.mxu0 0
  %452 = vmatpush1.bf16.msra.mxu0 0
  %453 = vmatprep.subr.bf16.mxu0 0
  %454 = vmatpush1.bf16.msra.mxu0 0
  %455 = vmatprep.subr.bf16.mxu0 0
  %456 = vmatpush1.bf16.msra.mxu0 0
  %457 = vmatprep.subr.bf16.mxu0 0
  %458 = vmatpush1.bf16.msra.mxu0 0
  %459 = vmatprep.subr.bf16.mxu0 0
  %460 = vmatpush1.bf16.msra.mxu0 0
  %461 = vmatprep.subr.bf16.mxu0 0
  %462 = vmatpush1.bf16.msra.mxu0 0
  %463 = vmatprep.subr.bf16.mxu0 0
  %464 = vmatpush1.bf16.msra.mxu0 0
  %465 = vmatprep.subr.bf16.mxu0 0
  %466 = vmatpush1.bf16.msra.mxu0 0
  %467 = vmatprep.subr.bf16.mxu0 0
  %468 = vmatpush1.bf16.msra.mxu0 0
  %469 = vmatprep.subr.bf16.mxu0 0
  %470 = vmatpush1.bf16.msra.mxu0 0
  %471 = vmatprep.mubr.bf16.mxu0 0
  %472 = vmatmul.mubr.bf16.gmra.mrb[0].mxu0 %v357
  %v473 = vpop.f32.mrb[0].mxu0
  %v474 = vadd.f32 %v434, %v473
  %v475 = vpop.f32.mrb[0].mxu0
  %v476 = vpop.f32.mrb[0].mxu0
  %v477 = vpop.f32.mrb[0].mxu0
  %478 = vdwg.mxu0
  %v479 = vmax.f32 %v474, 0.0
  %v480 = vpack.c.bf16 %v479, %v479
  %vm481 = vcmask 516096
  %482 = vst.msk [vmem:[%s3] sm:$0x1] %vm481, %v480
  // Predicated region
  $region14: #{net_forward.6} parent=0 // pred_check
    _
  $region15: #{net_forward.6} parent=0 // pred_check_branch
    %484 = sbr.rel (0) target = $region17
  $region16: #{net_forward.6} parent=0 // pred_region
    _
  $region17: #{net_forward.6} parent=0 // pred_fallthru
    _
  // Predicated region
  $region18: #{net_forward.6} parent=0 // pred_check
    _
  $region19: #{net_forward.6} parent=0 // pred_check_branch
    %486 = sbr.rel (0) target = $region21
  $region20: #{net_forward.6} parent=0 // pred_region
    _
  $region21: #{net_forward.6} parent=0 // pred_fallthru
    _

// kernel: net_forward.7
$region0: #{net_forward.7}
  #allocation0 [shape = 'u32[]', space=smem, size = 0x4, offset = 0x4, fixed_abs, tag = 'smem constant byte address 0x4 - core index']
  #allocation1 [shape = 'u32[144,128]{1,0:T(1,128)}', space=vmem, size = 0x12000, scoped, tag = 'internal scratch']
  %s0 = inlined_call_operand.vmem [shape: bf16[2,64], index: 0, kind: input, shape index: {}]
  %s1 = inlined_call_operand.vmem [shape: bf16[64,512], index: 1, kind: input, shape index: {}]
  %s2 = inlined_call_operand.vmem [shape: f32[1,512], index: 2, kind: input, shape index: {}]
  %s3 = inlined_call_operand.vmem [shape: bf16[512,128], index: 3, kind: input, shape index: {}]
  %s4 = inlined_call_operand.vmem [shape: f32[1,128], index: 4, kind: input, shape index: {}]
  %s5 = inlined_call_operand.hbm [shape: f32[2,128], index: 5, kind: output, shape index: {}]
  %s6 = sld [smem:[#allocation0]]
  $region30: #{net_forward.7} parent=0
    _
  %s8 = ssub.s32 1, %s6
  %s9 = scalar_select 0, %s8, %s6
  $region1: #{net_forward.7} parent=0
    #allocation2 [shape = 'u8[1024]{0}', space=vmem, size = 0x400, scoped, tag = 'output window, operand 0, single buffered']
    #allocation3 [shape = 's32[1]{0}', space=sflag, size = 0x4, scoped, tag = 'scoped memory for net_forward.7']
    %10 = vsyncpa [#allocation3], 0
    // Predicated region
    $region2: #{net_forward.7} parent=1 // pred_check
      _
    $region3: #{net_forward.7} parent=1 // pred_check_branch
      %12 = sbr.rel (0) target = $region5
    $region4: #{net_forward.7} parent=1 // pred_region
      _
    $region5: #{net_forward.7} parent=1 // pred_fallthru
      _
    // Predicated region
    $region6: #{net_forward.7} parent=1 // pred_check
      _
    $region7: #{net_forward.7} parent=1 // pred_check_branch
      %14 = sbr.rel (0) target = $region9
    $region8: #{net_forward.7} parent=1 // pred_region
      _
    $region9: #{net_forward.7} parent=1 // pred_fallthru
      _
    // Predicated region
    $region10: #{net_forward.7} parent=1 // pred_check
      _
    $region11: #{net_forward.7} parent=1 // pred_check_branch
      %16 = sbr.rel (0) target = $region13
    $region12: #{net_forward.7} parent=1 // pred_region
      _
    $region13: #{net_forward.7} parent=1 // pred_fallthru
      _
    // Predicated region
    $region14: #{net_forward.7} parent=1 // pred_check
      _
    $region15: #{net_forward.7} parent=1 // pred_check_branch
      %18 = sbr.rel (0) target = $region17
    $region16: #{net_forward.7} parent=1 // pred_region
      _
    $region17: #{net_forward.7} parent=1 // pred_fallthru
      _
    // Predicated region
    $region18: #{net_forward.7} parent=1 // pred_check
      _
    $region19: #{net_forward.7} parent=1 // pred_check_branch
      %20 = sbr.rel (0) target = $region21
    $region20: #{net_forward.7} parent=1 // pred_region
      _
    $region21: #{net_forward.7} parent=1 // pred_fallthru
      _
    %v22 = vld [vmem:[%s0] sm:$0x1]
    %v23 = vld [vmem:[%s1] sm:$0xff]
    %v24 = vld [vmem:[%s1 + $0x8] sm:$0xff]
    %v25 = vld [vmem:[%s1 + $0x10] sm:$0xff]
    %v26 = vld [vmem:[%s1 + $0x18] sm:$0xff]
    %v27 = vld [vmem:[%s1 + $0x20] sm:$0xff]
    %v28 = vld [vmem:[%s1 + $0x28] sm:$0xff]
    %v29 = vld [vmem:[%s1 + $0x30] sm:$0xff]
    %v30 = vld [vmem:[%s1 + $0x38] sm:$0xff]
    %v31 = vld [vmem:[%s1 + $0x40] sm:$0xff]
    %v32 = vld [vmem:[%s1 + $0x48] sm:$0xff]
    %v33 = vld [vmem:[%s1 + $0x50] sm:$0xff]
    %v34 = vld [vmem:[%s1 + $0x58] sm:$0xff]
    %v35 = vld [vmem:[%s1 + $0x60] sm:$0xff]
    %v36 = vld [vmem:[%s1 + $0x68] sm:$0xff]
    %v37 = vld [vmem:[%s1 + $0x70] sm:$0xff]
    %v38 = vld [vmem:[%s1 + $0x78] sm:$0xff]
    %v39 = vld [vmem:[%s2] sm:$0xf]
    %v41 = vlaneseq
    %v42 = vshrl.u32 %v41, 7
    %v43 = vsub.s32 0, %v42
    %v44 = vrot.slane %v39, %v43
    %v45 = vlaneseq
    %v46 = vshrl.u32 %v45, 7
    %v47 = vsub.s32 1, %v46
    %v48 = vrot.slane %v39, %v47
    %v49 = vlaneseq
    %v50 = vshrl.u32 %v49, 7
    %v51 = vsub.s32 2, %v50
    %v52 = vrot.slane %v39, %v51
    %v53 = vlaneseq
    %v54 = vshrl.u32 %v53, 7
    %v55 = vsub.s32 3, %v54
    %v56 = vrot.slane %v39, %v55
    %v77 = vunpack.c.l.b16 %v23
    %v78 = vunpack.c.h.b16 %v23
    %v79 = vunpack.c.l.b16 %v24
    %v80 = vunpack.c.h.b16 %v24
    %v81 = vunpack.c.l.b16 %v25
    %v82 = vunpack.c.h.b16 %v25
    %v83 = vunpack.c.l.b16 %v26
    %v84 = vunpack.c.h.b16 %v26
    %v85 = vunpack.c.l.b16 %v27
    %v86 = vunpack.c.h.b16 %v27
    %v87 = vunpack.c.l.b16 %v28
    %v88 = vunpack.c.h.b16 %v28
    %v89 = vunpack.c.l.b16 %v29
    %v90 = vunpack.c.h.b16 %v29
    %v91 = vunpack.c.l.b16 %v30
    %v92 = vunpack.c.h.b16 %v30
    %v93 = vunpack.c.l.b16 %v31
    %v94 = vunpack.c.h.b16 %v31
    %v95 = vunpack.c.l.b16 %v32
    %v96 = vunpack.c.h.b16 %v32
    %v97 = vunpack.c.l.b16 %v33
    %v98 = vunpack.c.h.b16 %v33
    %v99 = vunpack.c.l.b16 %v34
    %v100 = vunpack.c.h.b16 %v34
    %v101 = vunpack.c.l.b16 %v35
    %v102 = vunpack.c.h.b16 %v35
    %v103 = vunpack.c.l.b16 %v36
    %v104 = vunpack.c.h.b16 %v36
    %v105 = vunpack.c.l.b16 %v37
    %v106 = vunpack.c.h.b16 %v37
    %v107 = vunpack.c.l.b16 %v38
    %v108 = vunpack.c.h.b16 %v38
    %v109 = vpack.c.b16 %v81, %v77
    %v110 = vpack.c.b16 %v82, %v78
    %v111 = vpack.c.b16 %v83, %v79
    %v112 = vpack.c.b16 %v84, %v80
    %v113 = vpack.c.b16 %v89, %v85
    %v114 = vpack.c.b16 %v90, %v86
    %v115 = vpack.c.b16 %v91, %v87
    %v116 = vpack.c.b16 %v92, %v88
    %v117 = vpack.c.b16 %v97, %v93
    %v118 = vpack.c.b16 %v98, %v94
    %v119 = vpack.c.b16 %v99, %v95
    %v120 = vpack.c.b16 %v100, %v96
    %v121 = vpack.c.b16 %v105, %v101
    %v122 = vpack.c.b16 %v106, %v102
    %v123 = vpack.c.b16 %v107, %v103
    %v124 = vpack.c.b16 %v108, %v104
    %vm141 = vcmask 523264
    %v143 = vsel %vm141, %v22, 0
    %145 = vmatprep.subr.bf16.mxu0 %v110
    %146 = vmatpush1.bf16.msra.mxu0 %v109
    %147 = vmatprep.subr.bf16.mxu0 %v114
    %148 = vmatpush1.bf16.msra.mxu0 %v113
    %149 = vmatprep.subr.bf16.mxu0 %v118
    %150 = vmatpush1.bf16.msra.mxu0 %v117
    %151 = vmatprep.subr.bf16.mxu0 %v122
    %152 = vmatpush1.bf16.msra.mxu0 %v121
    %153 = vmatprep.subr.bf16.mxu0 0
    %154 = vmatpush1.bf16.msra.mxu0 0
    %155 = vmatprep.subr.bf16.mxu0 0
    %156 = vmatpush1.bf16.msra.mxu0 0
    %157 = vmatprep.subr.bf16.mxu0 0
    %158 = vmatpush1.bf16.msra.mxu0 0
    %159 = vmatprep.subr.bf16.mxu0 0
    %160 = vmatpush1.bf16.msra.mxu0 0
    %161 = vmatprep.subr.bf16.mxu0 0
    %162 = vmatpush1.bf16.msra.mxu0 0
    %163 = vmatprep.subr.bf16.mxu0 0
    %164 = vmatpush1.bf16.msra.mxu0 0
    %165 = vmatprep.subr.bf16.mxu0 0
    %166 = vmatpush1.bf16.msra.mxu0 0
    %167 = vmatprep.subr.bf16.mxu0 0
    %168 = vmatpush1.bf16.msra.mxu0 0
    %169 = vmatprep.subr.bf16.mxu0 0
    %170 = vmatpush1.bf16.msra.mxu0 0
    %171 = vmatprep.subr.bf16.mxu0 0
    %172 = vmatpush1.bf16.msra.mxu0 0
    %173 = vmatprep.subr.bf16.mxu0 0
    %174 = vmatpush1.bf16.msra.mxu0 0
    %175 = vmatprep.subr.bf16.mxu0 0
    %176 = vmatpush1.bf16.msra.mxu0 0
    %177 = vmatprep.mubr.bf16.mxu0 0
    %178 = vmatmul.mubr.bf16.gmra.mrb[0].mxu0 %v143
    %v179 = vpop.f32.mrb[0].mxu0
    %v180 = vadd.f32 %v44, %v179
    %v181 = vpop.f32.mrb[0].mxu0
    %v182 = vadd.f32 %v48, %v181
    %v183 = vpop.f32.mrb[0].mxu0
    %v184 = vpop.f32.mrb[0].mxu0
    %185 = vdwg.mxu0
    %186 = vmatprep.subr.bf16.mxu0 %v112
    %187 = vmatpush1.bf16.msra.mxu0 %v111
    %188 = vmatprep.subr.bf16.mxu0 %v116
    %189 = vmatpush1.bf16.msra.mxu0 %v115
    %190 = vmatprep.subr.bf16.mxu0 %v120
    %191 = vmatpush1.bf16.msra.mxu0 %v119
    %192 = vmatprep.subr.bf16.mxu0 %v124
    %193 = vmatpush1.bf16.msra.mxu0 %v123
    %194 = vmatprep.subr.bf16.mxu0 0
    %195 = vmatpush1.bf16.msra.mxu0 0
    %196 = vmatprep.subr.bf16.mxu0 0
    %197 = vmatpush1.bf16.msra.mxu0 0
    %198 = vmatprep.subr.bf16.mxu0 0
    %199 = vmatpush1.bf16.msra.mxu0 0
    %200 = vmatprep.subr.bf16.mxu0 0
    %201 = vmatpush1.bf16.msra.mxu0 0
    %202 = vmatprep.subr.bf16.mxu0 0
    %203 = vmatpush1.bf16.msra.mxu0 0
    %204 = vmatprep.subr.bf16.mxu0 0
    %205 = vmatpush1.bf16.msra.mxu0 0
    %206 = vmatprep.subr.bf16.mxu0 0
    %207 = vmatpush1.bf16.msra.mxu0 0
    %208 = vmatprep.subr.bf16.mxu0 0
    %209 = vmatpush1.bf16.msra.mxu0 0
    %210 = vmatprep.subr.bf16.mxu0 0
    %211 = vmatpush1.bf16.msra.mxu0 0
    %212 = vmatprep.subr.bf16.mxu0 0
    %213 = vmatpush1.bf16.msra.mxu0 0
    %214 = vmatprep.subr.bf16.mxu0 0
    %215 = vmatpush1.bf16.msra.mxu0 0
    %216 = vmatprep.subr.bf16.mxu0 0
    %217 = vmatpush1.bf16.msra.mxu0 0
    %218 = vmatprep.mubr.bf16.mxu0 0
    %219 = vmatmul.mubr.bf16.gmra.mrb[0].mxu0 %v143
    %v220 = vpop.f32.mrb[0].mxu0
    %v221 = vadd.f32 %v52, %v220
    %v222 = vpop.f32.mrb[0].mxu0
    %v223 = vadd.f32 %v56, %v222
    %v224 = vpop.f32.mrb[0].mxu0
    %v225 = vpop.f32.mrb[0].mxu0
    %226 = vdwg.mxu0
    %v227 = vmax.f32 %v180, 0.0
    %v228 = vmax.f32 %v182, 0.0
    %v229 = vmax.f32 %v221, 0.0
    %v230 = vmax.f32 %v223, 0.0
    %v231 = vpack.c.bf16 %v227, %v227
    %v232 = vpack.c.bf16 %v228, %v228
    %v233 = vpack.c.bf16 %v229, %v229
    %v234 = vpack.c.bf16 %v230, %v230
    %v235 = vld [vmem:[%s3] sm:$0xf]
    %v236 = vld [vmem:[%s3 + $0x4] sm:$0xf]
    %v237 = vld [vmem:[%s3 + $0x8] sm:$0xf]
    %v238 = vld [vmem:[%s3 + $0xc] sm:$0xf]
    %v239 = vld [vmem:[%s3 + $0x10] sm:$0xf]
    %v240 = vld [vmem:[%s3 + $0x14] sm:$0xf]
    %v241 = vld [vmem:[%s3 + $0x18] sm:$0xf]
    %v242 = vld [vmem:[%s3 + $0x1c] sm:$0xf]
    %v243 = vld [vmem:[%s3 + $0x20] sm:$0xf]
    %v244 = vld [vmem:[%s3 + $0x24] sm:$0xf]
    %v245 = vld [vmem:[%s3 + $0x28] sm:$0xf]
    %v246 = vld [vmem:[%s3 + $0x2c] sm:$0xf]
    %v247 = vld [vmem:[%s3 + $0x30] sm:$0xf]
    %v248 = vld [vmem:[%s3 + $0x34] sm:$0xf]
    %v249 = vld [vmem:[%s3 + $0x38] sm:$0xf]
    %v250 = vld [vmem:[%s3 + $0x3c] sm:$0xf]
    %v251 = vld [vmem:[%s3 + $0x40] sm:$0xf]
    %v252 = vld [vmem:[%s3 + $0x44] sm:$0xf]
    %v253 = vld [vmem:[%s3 + $0x48] sm:$0xf]
    %v254 = vld [vmem:[%s3 + $0x4c] sm:$0xf]
    %v255 = vld [vmem:[%s3 + $0x50] sm:$0xf]
    %v256 = vld [vmem:[%s3 + $0x54] sm:$0xf]
    %v257 = vld [vmem:[%s3 + $0x58] sm:$0xf]
    %v258 = vld [vmem:[%s3 + $0x5c] sm:$0xf]
    %v259 = vld [vmem:[%s3 + $0x60] sm:$0xf]
    %v260 = vld [vmem:[%s3 + $0x64] sm:$0xf]
    %v261 = vld [vmem:[%s3 + $0x68] sm:$0xf]
    %v262 = vld [vmem:[%s3 + $0x6c] sm:$0xf]
    %v263 = vld [vmem:[%s3 + $0x70] sm:$0xf]
    %v264 = vld [vmem:[%s3 + $0x74] sm:$0xf]
    %v265 = vld [vmem:[%s3 + $0x78] sm:$0xf]
    %v266 = vld [vmem:[%s3 + $0x7c] sm:$0xf]
    %v267 = vld [vmem:[%s3 + $0x80] sm:$0xf]
    %v268 = vld [vmem:[%s3 + $0x84] sm:$0xf]
    %v269 = vld [vmem:[%s3 + $0x88] sm:$0xf]
    %v270 = vld [vmem:[%s3 + $0x8c] sm:$0xf]
    %v271 = vld [vmem:[%s3 + $0x90] sm:$0xf]
    %v272 = vld [vmem:[%s3 + $0x94] sm:$0xf]
    %v273 = vld [vmem:[%s3 + $0x98] sm:$0xf]
    %v274 = vld [vmem:[%s3 + $0x9c] sm:$0xf]
    %v275 = vld [vmem:[%s3 + $0xa0] sm:$0xf]
    %v276 = vld [vmem:[%s3 + $0xa4] sm:$0xf]
    %v277 = vld [vmem:[%s3 + $0xa8] sm:$0xf]
    %v278 = vld [vmem:[%s3 + $0xac] sm:$0xf]
    %v279 = vld [vmem:[%s3 + $0xb0] sm:$0xf]
    %v280 = vld [vmem:[%s3 + $0xb4] sm:$0xf]
    %v281 = vld [vmem:[%s3 + $0xb8] sm:$0xf]
    %v282 = vld [vmem:[%s3 + $0xbc] sm:$0xf]
    %v283 = vld [vmem:[%s3 + $0xc0] sm:$0xf]
    %v284 = vld [vmem:[%s3 + $0xc4] sm:$0xf]
    %v285 = vld [vmem:[%s3 + $0xc8] sm:$0xf]
    %v286 = vld [vmem:[%s3 + $0xcc] sm:$0xf]
    %v287 = vld [vmem:[%s3 + $0xd0] sm:$0xf]
    %v288 = vld [vmem:[%s3 + $0xd4] sm:$0xf]
    %v289 = vld [vmem:[%s3 + $0xd8] sm:$0xf]
    %v290 = vld [vmem:[%s3 + $0xdc] sm:$0xf]
    %v291 = vld [vmem:[%s3 + $0xe0] sm:$0xf]
    %v292 = vld [vmem:[%s3 + $0xe4] sm:$0xf]
    %v293 = vld [vmem:[%s3 + $0xe8] sm:$0xf]
    %v294 = vld [vmem:[%s3 + $0xec] sm:$0xf]
    %v295 = vld [vmem:[%s3 + $0xf0] sm:$0xf]
    %v296 = vld [vmem:[%s3 + $0xf4] sm:$0xf]
    %v297 = vld [vmem:[%s3 + $0xf8] sm:$0xf]
    %v298 = vld [vmem:[%s3 + $0xfc] sm:$0xf]
    %v299 = vld [vmem:[%s4] sm:$0x1]
    %v301 = vlaneseq
    %v302 = vshrl.u32 %v301, 7
    %v303 = vsub.s32 0, %v302
    %v304 = vrot.slane %v299, %v303
    %v370 = vunpack.c.l.b16 %v235
    %v371 = vunpack.c.l.b16 %v236
    %v372 = vunpack.c.l.b16 %v237
    %v373 = vunpack.c.l.b16 %v238
    %v374 = vunpack.c.l.b16 %v239
    %v375 = vunpack.c.l.b16 %v240
    %v376 = vunpack.c.l.b16 %v241
    %v377 = vunpack.c.l.b16 %v242
    %v378 = vunpack.c.l.b16 %v243
    %v379 = vunpack.c.l.b16 %v244
    %v380 = vunpack.c.l.b16 %v245
    %v381 = vunpack.c.l.b16 %v246
    %v382 = vunpack.c.l.b16 %v247
    %v383 = vunpack.c.l.b16 %v248
    %v384 = vunpack.c.l.b16 %v249
    %v385 = vunpack.c.l.b16 %v250
    %v386 = vunpack.c.l.b16 %v251
    %v387 = vunpack.c.l.b16 %v252
    %v388 = vunpack.c.l.b16 %v253
    %v389 = vunpack.c.l.b16 %v254
    %v390 = vunpack.c.l.b16 %v255
    %v391 = vunpack.c.l.b16 %v256
    %v392 = vunpack.c.l.b16 %v257
    %v393 = vunpack.c.l.b16 %v258
    %v394 = vunpack.c.l.b16 %v259
    %v395 = vunpack.c.l.b16 %v260
    %v396 = vunpack.c.l.b16 %v261
    %v397 = vunpack.c.l.b16 %v262
    %v398 = vunpack.c.l.b16 %v263
    %v399 = vunpack.c.l.b16 %v264
    %v400 = vunpack.c.l.b16 %v265
    %v401 = vunpack.c.l.b16 %v266
    %v402 = vunpack.c.l.b16 %v267
    %v403 = vunpack.c.l.b16 %v268
    %v404 = vunpack.c.l.b16 %v269
    %v405 = vunpack.c.l.b16 %v270
    %v406 = vunpack.c.l.b16 %v271
    %v407 = vunpack.c.l.b16 %v272
    %v408 = vunpack.c.l.b16 %v273
    %v409 = vunpack.c.l.b16 %v274
    %v410 = vunpack.c.l.b16 %v275
    %v411 = vunpack.c.l.b16 %v276
    %v412 = vunpack.c.l.b16 %v277
    %v413 = vunpack.c.l.b16 %v278
    %v414 = vunpack.c.l.b16 %v279
    %v415 = vunpack.c.l.b16 %v280
    %v416 = vunpack.c.l.b16 %v281
    %v417 = vunpack.c.l.b16 %v282
    %v418 = vunpack.c.l.b16 %v283
    %v419 = vunpack.c.l.b16 %v284
    %v420 = vunpack.c.l.b16 %v285
    %v421 = vunpack.c.l.b16 %v286
    %v422 = vunpack.c.l.b16 %v287
    %v423 = vunpack.c.l.b16 %v288
    %v424 = vunpack.c.l.b16 %v289
    %v425 = vunpack.c.l.b16 %v290
    %v426 = vunpack.c.l.b16 %v291
    %v427 = vunpack.c.l.b16 %v292
    %v428 = vunpack.c.l.b16 %v293
    %v429 = vunpack.c.l.b16 %v294
    %v430 = vunpack.c.l.b16 %v295
    %v431 = vunpack.c.l.b16 %v296
    %v432 = vunpack.c.l.b16 %v297
    %v433 = vunpack.c.l.b16 %v298
    %v434 = vpack.c.b16 %v371, %v370
    %v435 = vpack.c.b16 %v373, %v372
    %v436 = vpack.c.b16 %v375, %v374
    %v437 = vpack.c.b16 %v377, %v376
    %v438 = vpack.c.b16 %v379, %v378
    %v439 = vpack.c.b16 %v381, %v380
    %v440 = vpack.c.b16 %v383, %v382
    %v441 = vpack.c.b16 %v385, %v384
    %v442 = vpack.c.b16 %v387, %v386
    %v443 = vpack.c.b16 %v389, %v388
    %v444 = vpack.c.b16 %v391, %v390
    %v445 = vpack.c.b16 %v393, %v392
    %v446 = vpack.c.b16 %v395, %v394
    %v447 = vpack.c.b16 %v397, %v396
    %v448 = vpack.c.b16 %v399, %v398
    %v449 = vpack.c.b16 %v401, %v400
    %v450 = vpack.c.b16 %v403, %v402
    %v451 = vpack.c.b16 %v405, %v404
    %v452 = vpack.c.b16 %v407, %v406
    %v453 = vpack.c.b16 %v409, %v408
    %v454 = vpack.c.b16 %v411, %v410
    %v455 = vpack.c.b16 %v413, %v412
    %v456 = vpack.c.b16 %v415, %v414
    %v457 = vpack.c.b16 %v417, %v416
    %v458 = vpack.c.b16 %v419, %v418
    %v459 = vpack.c.b16 %v421, %v420
    %v460 = vpack.c.b16 %v423, %v422
    %v461 = vpack.c.b16 %v425, %v424
    %v462 = vpack.c.b16 %v427, %v426
    %v463 = vpack.c.b16 %v429, %v428
    %v464 = vpack.c.b16 %v431, %v430
    %v465 = vpack.c.b16 %v433, %v432
    %498 = vmatprep.subr.bf16.mxu0 0
    %499 = vmatpush1.bf16.msra.mxu0 %v434
    %500 = vmatprep.subr.bf16.mxu0 0
    %501 = vmatpush1.bf16.msra.mxu0 %v435
    %502 = vmatprep.subr.bf16.mxu0 0
    %503 = vmatpush1.bf16.msra.mxu0 %v436
    %504 = vmatprep.subr.bf16.mxu0 0
    %505 = vmatpush1.bf16.msra.mxu0 %v437
    %506 = vmatprep.subr.bf16.mxu0 0
    %507 = vmatpush1.bf16.msra.mxu0 %v438
    %508 = vmatprep.subr.bf16.mxu0 0
    %509 = vmatpush1.bf16.msra.mxu0 %v439
    %510 = vmatprep.subr.bf16.mxu0 0
    %511 = vmatpush1.bf16.msra.mxu0 %v440
    %512 = vmatprep.subr.bf16.mxu0 0
    %513 = vmatpush1.bf16.msra.mxu0 %v441
    %514 = vmatprep.subr.bf16.mxu0 0
    %515 = vmatpush1.bf16.msra.mxu0 %v442
    %516 = vmatprep.subr.bf16.mxu0 0
    %517 = vmatpush1.bf16.msra.mxu0 %v443
    %518 = vmatprep.subr.bf16.mxu0 0
    %519 = vmatpush1.bf16.msra.mxu0 %v444
    %520 = vmatprep.subr.bf16.mxu0 0
    %521 = vmatpush1.bf16.msra.mxu0 %v445
    %522 = vmatprep.subr.bf16.mxu0 0
    %523 = vmatpush1.bf16.msra.mxu0 %v446
    %524 = vmatprep.subr.bf16.mxu0 0
    %525 = vmatpush1.bf16.msra.mxu0 %v447
    %526 = vmatprep.subr.bf16.mxu0 0
    %527 = vmatpush1.bf16.msra.mxu0 %v448
    %528 = vmatprep.subr.bf16.mxu0 0
    %529 = vmatpush1.bf16.msra.mxu0 %v449
    %530 = vmatprep.mubr.bf16.mxu0 %v232
    %531 = vmatmul.mubr.bf16.gmra.mrb[0].mxu0 %v231
    %v532 = vpop.f32.mrb[0].mxu0
    %v533 = vadd.f32 %v304, %v532
    %v534 = vpop.f32.mrb[0].mxu0
    %v535 = vpop.f32.mrb[0].mxu0
    %v536 = vpop.f32.mrb[0].mxu0
    %537 = vdwg.mxu0
    %538 = vmatprep.subr.bf16.mxu0 0
    %539 = vmatpush1.bf16.msra.mxu0 %v450
    %540 = vmatprep.subr.bf16.mxu0 0
    %541 = vmatpush1.bf16.msra.mxu0 %v451
    %542 = vmatprep.subr.bf16.mxu0 0
    %543 = vmatpush1.bf16.msra.mxu0 %v452
    %544 = vmatprep.subr.bf16.mxu0 0
    %545 = vmatpush1.bf16.msra.mxu0 %v453
    %546 = vmatprep.subr.bf16.mxu0 0
    %547 = vmatpush1.bf16.msra.mxu0 %v454
    %548 = vmatprep.subr.bf16.mxu0 0
    %549 = vmatpush1.bf16.msra.mxu0 %v455
    %550 = vmatprep.subr.bf16.mxu0 0
    %551 = vmatpush1.bf16.msra.mxu0 %v456
    %552 = vmatprep.subr.bf16.mxu0 0
    %553 = vmatpush1.bf16.msra.mxu0 %v457
    %554 = vmatprep.subr.bf16.mxu0 0
    %555 = vmatpush1.bf16.msra.mxu0 %v458
    %556 = vmatprep.subr.bf16.mxu0 0
    %557 = vmatpush1.bf16.msra.mxu0 %v459
    %558 = vmatprep.subr.bf16.mxu0 0
    %559 = vmatpush1.bf16.msra.mxu0 %v460
    %560 = vmatprep.subr.bf16.mxu0 0
    %561 = vmatpush1.bf16.msra.mxu0 %v461
    %562 = vmatprep.subr.bf16.mxu0 0
    %563 = vmatpush1.bf16.msra.mxu0 %v462
    %564 = vmatprep.subr.bf16.mxu0 0
    %565 = vmatpush1.bf16.msra.mxu0 %v463
    %566 = vmatprep.subr.bf16.mxu0 0
    %567 = vmatpush1.bf16.msra.mxu0 %v464
    %568 = vmatprep.subr.bf16.mxu0 0
    %569 = vmatpush1.bf16.msra.mxu0 %v465
    %570 = vmatprep.mubr.bf16.mxu0 %v234
    %571 = vmatmul.mubr.bf16.gmra.mrb[0].mxu0 %v233
    %v572 = vpop.f32.mrb[0].mxu0
    %v573 = vadd.f32 %v533, %v572
    %v574 = vpop.f32.mrb[0].mxu0
    %v575 = vpop.f32.mrb[0].mxu0
    %v576 = vpop.f32.mrb[0].mxu0
    %577 = vdwg.mxu0
    %578 = vst [vmem:[#allocation2] sm:$0x3] %v573
    // Predicated region
    $region22: #{net_forward.7} parent=1 // pred_check
      _
    $region23: #{net_forward.7} parent=1 // pred_check_branch
      %580 = sbr.rel (0) target = $region25
    $region24: #{net_forward.7} parent=1 // pred_region
      %s582 = ssub.s32 32, 32
      %583 = vsyncadd [#allocation3], %s582
      %s585 = sshll.u32 [#allocation2], 4
      %s586 = int_to_ptr.vmem [resolvable:$true] %s585
      %588 = dma.vmem_to_hbm [thread:$0]  %s586, 32, %s5, [#allocation3]
    $region25: #{net_forward.7} parent=1 // pred_fallthru
      _
    // Predicated region
    $region26: #{net_forward.7} parent=1 // pred_check
      _
    $region27: #{net_forward.7} parent=1 // pred_check_branch
      %590 = sbr.rel (0) target = $region29
    $region28: #{net_forward.7} parent=1 // pred_region
      %591 = dma.done [#allocation3], 32
    $region29: #{net_forward.7} parent=1 // pred_fallthru
      _
    %592 = vsyncpa [#allocation3], 1

</llo_original>
